<compile_context>
chip_gen: v7x
topology: tpu7x:2x2x1
jax: 0.10.0
libtpu: 0.0.40
codegen_flags: <defaults>
</compile_context>

<pallas_src>
import math
import jax
import jax.numpy as jnp
from jax.experimental import pallas as pl
from jax.experimental.pallas import tpu as pltpu


def make_video_generator_kernel(num_layers: int, hidden_size: int, seq_len: int, batch: int):
    H = hidden_size
    T = seq_len
    B = batch

    def kernel(*refs):
        # refs layout:
        #   [0]            x0                 (T*B, 3)    frames, timestep-major
        #   [1 + 3*l + 0]  w_ih_t (layer l)   (in_l, 4H)  pre-transposed
        #   [1 + 3*l + 1]  w_hh_t (layer l)   (H, 4H)     pre-transposed
        #   [1 + 3*l + 2]  b      (layer l)   (1, 4H)     (= b_ih + b_hh)
        #   [1 + 3*L]      w_fc_t             (H, 3)      pre-transposed
        #   [2 + 3*L]      b_fc               (1, 3)
        #   [3 + 3*L]      out_ref            (B, 3)
        x_ref = refs[0]
        layer_refs = refs[1:1 + 3 * num_layers]
        w_fc_ref = refs[1 + 3 * num_layers]
        b_fc_ref = refs[2 + 3 * num_layers]
        out_ref = refs[3 + 3 * num_layers]

        layer_in = x_ref[...].astype(jnp.float32)          # (T*B, 3)
        h_last = None

        for l in range(num_layers):
            w_ih_t = layer_refs[3 * l + 0][...]            # (in_l, 4H)
            w_hh_t = layer_refs[3 * l + 1][...]            # (H, 4H)
            b = layer_refs[3 * l + 2][...]                 # (1, 4H)

            # Hoisted input projection + bias for ALL timesteps in one MXU call:
            #   (T*B, in_l) @ (in_l, 4H) + (1, 4H) -> (T*B, 4H)
            # Note: default MXU f32 precision passes 1e-5 vs the f32 reference at this
            # size; pass precision=jax.lax.Precision.HIGHEST for tighter tolerances.
            x_proj = jnp.dot(layer_in, w_ih_t, preferred_element_type=jnp.float32) + b

            last_layer = l == num_layers - 1
            h = jnp.zeros((B, H), jnp.float32)
            c = jnp.zeros((B, H), jnp.float32)
            outs = []
            for t in range(T):
                # Only the recurrent matmul sits on the serial dependency chain;
                # the x_proj slice does not depend on h and schedules off-path.
                gates = x_proj[t * B:(t + 1) * B, :] + jnp.dot(
                    h, w_hh_t, preferred_element_type=jnp.float32)      # (B, 4H)
                # Full-lane-width transcendentals (EUP slot), then split gate blocks.
                sg = jax.nn.sigmoid(gates)                               # i, f, _, o
                tg = jnp.tanh(gates)                                     # _, _, g, _
                i_g = sg[:, 0 * H:1 * H]
                f_g = sg[:, 1 * H:2 * H]
                g_g = tg[:, 2 * H:3 * H]
                o_g = sg[:, 3 * H:4 * H]
                c = f_g * c + i_g * g_g
                h = o_g * jnp.tanh(c)
                if not last_layer:
                    outs.append(h)

            if last_layer:
                h_last = h
            else:
                # Timestep-major stack feeding the next layer's hoisted projection.
                # (For large T, stage this in a pltpu.VMEM((T*B, H)) scratch instead.)
                layer_in = jnp.concatenate(outs, axis=0)   # (T*B, H)

        # Final FC on the last timestep of the top layer: (B, H) @ (H, 3) + (1, 3)
        out = jnp.dot(h_last, w_fc_ref[...], preferred_element_type=jnp.float32) + b_fc_ref[...]
        out_ref[...] = out.astype(out_ref.dtype)

    return kernel


def video_generator_forward(frames, params):
    """frames: (B, T, 3) float32 -> (B, 3) float32 (nn.LSTM(batch_first) + Linear on last step)."""
    num_layers = len(params["lstm"])
    H = params["lstm"][0]["w_hh"].shape[1]
    B, T, C = frames.shape

    # Host-side layout plumbing (one-time, outside the kernel):
    #   * frames -> timestep-major (T*B, 3) slab for the hoisted layer-0 projection
    #   * all weights pre-transposed so the kernel never emits a `.T`
    x0 = jnp.transpose(frames, (1, 0, 2)).reshape(T * B, C).astype(jnp.float32)

    inputs = [x0]
    for layer in params["lstm"]:
        inputs += [layer["w_ih"].T, layer["w_hh"].T, layer["b"]]
    inputs += [params["w_fc"].T, params["b_fc"]]

    kernel = make_video_generator_kernel(num_layers, H, T, B)

    return pl.pallas_call(
        kernel,
        out_shape=jax.ShapeDtypeStruct((B, 3), jnp.float32),
        in_specs=[pl.BlockSpec(memory_space=pltpu.MemorySpace.VMEM)] * len(inputs),
        out_specs=pl.BlockSpec(memory_space=pltpu.MemorySpace.VMEM),
    )(*inputs)


def init_params(key, num_layers, hidden_size, input_size=3, out_size=3):
    """Deterministic init mimicking PyTorch's U(-1/sqrt(H), 1/sqrt(H))."""
    H = hidden_size
    bound = 1.0 / math.sqrt(H)
    lstm = []
    for l in range(num_layers):
        in_l = input_size if l == 0 else H
        key, k1, k2, k3, k4 = jax.random.split(key, 5)
        w_ih = jax.random.uniform(k1, (4 * H, in_l), jnp.float32, -bound, bound)
        w_hh = jax.random.uniform(k2, (4 * H, H), jnp.float32, -bound, bound)
        b_ih = jax.random.uniform(k3, (4 * H,), jnp.float32, -bound, bound)
        b_hh = jax.random.uniform(k4, (4 * H,), jnp.float32, -bound, bound)
        lstm.append({"w_ih": w_ih, "w_hh": w_hh, "b": (b_ih + b_hh)[None, :]})
    key, k1, k2 = jax.random.split(key, 3)
    w_fc = jax.random.uniform(k1, (out_size, H), jnp.float32, -bound, bound)
    b_fc = jax.random.uniform(k2, (out_size,), jnp.float32, -bound, bound)[None, :]
    return {"lstm": lstm, "w_fc": w_fc, "b_fc": b_fc}


def reference_forward(frames, params):
    """Pure-JAX reference (same math as torch nn.LSTM + Linear)."""
    B, T, _ = frames.shape
    H = params["lstm"][0]["w_hh"].shape[1]
    layer_in = frames.astype(jnp.float32)
    for layer in params["lstm"]:
        w_ih, w_hh, b = layer["w_ih"], layer["w_hh"], layer["b"]
        h = jnp.zeros((B, H), jnp.float32)
        c = jnp.zeros((B, H), jnp.float32)
        outs = []
        for t in range(T):
            gates = layer_in[:, t, :] @ w_ih.T + h @ w_hh.T + b
            i_g = jax.nn.sigmoid(gates[:, 0 * H:1 * H])
            f_g = jax.nn.sigmoid(gates[:, 1 * H:2 * H])
            g_g = jnp.tanh(gates[:, 2 * H:3 * H])
            o_g = jax.nn.sigmoid(gates[:, 3 * H:4 * H])
            c = f_g * c + i_g * g_g
            h = o_g * jnp.tanh(c)
            outs.append(h)
        layer_in = jnp.stack(outs, axis=1)
    return layer_in[:, -1, :] @ params["w_fc"].T + params["b_fc"]


if __name__ == "__main__":
    B, T, H, L = 2, 8, 32, 2
    key = jax.random.PRNGKey(0)
    key, k_frames, k_params = jax.random.split(key, 3)

    frames = jax.random.normal(k_frames, (B, T, 3), jnp.float32)
    params = init_params(k_params, num_layers=L, hidden_size=H)

    out = video_generator_forward(frames, params)
    out = jax.block_until_ready(out)

    ref = reference_forward(frames, params)
    assert out.shape == (B, 3)
    assert jnp.allclose(out, ref, atol=2e-5, rtol=2e-5), (out, ref)

    print("KERNEL_OK")
</pallas_src>

<mosaic_0001>
module attributes {stable_mosaic.version = 11 : i64} {
  func.func @kernel(%arg0: memref<16x3xf32, #tpu.memory_space<vmem>>, %arg1: memref<3x128xf32, #tpu.memory_space<vmem>>, %arg2: memref<32x128xf32, #tpu.memory_space<vmem>>, %arg3: memref<1x128xf32, #tpu.memory_space<vmem>>, %arg4: memref<32x128xf32, #tpu.memory_space<vmem>>, %arg5: memref<32x128xf32, #tpu.memory_space<vmem>>, %arg6: memref<1x128xf32, #tpu.memory_space<vmem>>, %arg7: memref<32x3xf32, #tpu.memory_space<vmem>>, %arg8: memref<1x3xf32, #tpu.memory_space<vmem>>, %arg9: memref<2x3xf32, #tpu.memory_space<vmem>>) attributes {dimension_semantics = [], scalar_prefetch = 0 : i64, scratch_operands = 0 : i64, tpu.core_type = #tpu.core_type<tc>} {
    %c0 = arith.constant 0 : index
    %c0_0 = arith.constant 0 : index
    %0 = vector.load %arg0[%c0, %c0_0] : memref<16x3xf32, #tpu.memory_space<vmem>>, vector<16x3xf32>
    %c0_1 = arith.constant 0 : index
    %c0_2 = arith.constant 0 : index
    %1 = vector.load %arg1[%c0_1, %c0_2] : memref<3x128xf32, #tpu.memory_space<vmem>>, vector<3x128xf32>
    %c0_3 = arith.constant 0 : index
    %c0_4 = arith.constant 0 : index
    %2 = vector.load %arg2[%c0_3, %c0_4] : memref<32x128xf32, #tpu.memory_space<vmem>>, vector<32x128xf32>
    %c0_5 = arith.constant 0 : index
    %c0_6 = arith.constant 0 : index
    %3 = vector.load %arg3[%c0_5, %c0_6] : memref<1x128xf32, #tpu.memory_space<vmem>>, vector<1x128xf32>
    %cst = arith.constant dense<0.000000e+00> : vector<16x128xf32>
    %4 = tpu.matmul %0, %1, %cst {dimension_numbers = #tpu.dot_dimension_numbers<[1], [0], [0], [1], [0, 0, 1, 1], [], []>} : vector<16x3xf32>, vector<3x128xf32>, vector<16x128xf32> -> vector<16x128xf32>
    %5 = vector.broadcast %3 : vector<1x128xf32> to vector<16x128xf32>
    %6 = arith.addf %4, %5 : vector<16x128xf32>
    %cst_7 = arith.constant 0.000000e+00 : f32
    %7 = vector.broadcast %cst_7 : f32 to vector<2x32xf32>
    %cst_8 = arith.constant 0.000000e+00 : f32
    %8 = vector.broadcast %cst_8 : f32 to vector<2x32xf32>
    %9 = vector.extract_strided_slice %6 {offsets = [0, 0], sizes = [2, 128], strides = [1, 1]} : vector<16x128xf32> to vector<2x128xf32>
    %cst_9 = arith.constant dense<0.000000e+00> : vector<2x128xf32>
    %10 = tpu.matmul %7, %2, %cst_9 {dimension_numbers = #tpu.dot_dimension_numbers<[1], [0], [0], [1], [0, 0, 1, 1], [], []>} : vector<2x32xf32>, vector<32x128xf32>, vector<2x128xf32> -> vector<2x128xf32>
    %11 = arith.addf %9, %10 : vector<2x128xf32>
    %12 = arith.negf %11 : vector<2x128xf32>
    %13 = math.exp %12 : vector<2x128xf32>
    %cst_10 = arith.constant 1.000000e+00 : f32
    %14 = vector.broadcast %cst_10 : f32 to vector<2x128xf32>
    %15 = arith.addf %14, %13 : vector<2x128xf32>
    %16 = arith.divf %14, %15 : vector<2x128xf32>
    %17 = math.tanh %11 : vector<2x128xf32>
    %18 = vector.extract_strided_slice %16 {offsets = [0, 0], sizes = [2, 32], strides = [1, 1]} : vector<2x128xf32> to vector<2x32xf32>
    %19 = vector.extract_strided_slice %16 {offsets = [0, 32], sizes = [2, 32], strides = [1, 1]} : vector<2x128xf32> to vector<2x32xf32>
    %20 = vector.extract_strided_slice %17 {offsets = [0, 64], sizes = [2, 32], strides = [1, 1]} : vector<2x128xf32> to vector<2x32xf32>
    %21 = vector.extract_strided_slice %16 {offsets = [0, 96], sizes = [2, 32], strides = [1, 1]} : vector<2x128xf32> to vector<2x32xf32>
    %22 = arith.mulf %19, %8 : vector<2x32xf32>
    %23 = arith.mulf %18, %20 : vector<2x32xf32>
    %24 = arith.addf %22, %23 : vector<2x32xf32>
    %25 = math.tanh %24 : vector<2x32xf32>
    %26 = arith.mulf %21, %25 : vector<2x32xf32>
    %27 = vector.extract_strided_slice %6 {offsets = [2, 0], sizes = [2, 128], strides = [1, 1]} : vector<16x128xf32> to vector<2x128xf32>
    %cst_11 = arith.constant dense<0.000000e+00> : vector<2x128xf32>
    %28 = tpu.matmul %26, %2, %cst_11 {dimension_numbers = #tpu.dot_dimension_numbers<[1], [0], [0], [1], [0, 0, 1, 1], [], []>} : vector<2x32xf32>, vector<32x128xf32>, vector<2x128xf32> -> vector<2x128xf32>
    %29 = arith.addf %27, %28 : vector<2x128xf32>
    %30 = arith.negf %29 : vector<2x128xf32>
    %31 = math.exp %30 : vector<2x128xf32>
    %cst_12 = arith.constant 1.000000e+00 : f32
    %32 = vector.broadcast %cst_12 : f32 to vector<2x128xf32>
    %33 = arith.addf %32, %31 : vector<2x128xf32>
    %34 = arith.divf %32, %33 : vector<2x128xf32>
    %35 = math.tanh %29 : vector<2x128xf32>
    %36 = vector.extract_strided_slice %34 {offsets = [0, 0], sizes = [2, 32], strides = [1, 1]} : vector<2x128xf32> to vector<2x32xf32>
    %37 = vector.extract_strided_slice %34 {offsets = [0, 32], sizes = [2, 32], strides = [1, 1]} : vector<2x128xf32> to vector<2x32xf32>
    %38 = vector.extract_strided_slice %35 {offsets = [0, 64], sizes = [2, 32], strides = [1, 1]} : vector<2x128xf32> to vector<2x32xf32>
    %39 = vector.extract_strided_slice %34 {offsets = [0, 96], sizes = [2, 32], strides = [1, 1]} : vector<2x128xf32> to vector<2x32xf32>
    %40 = arith.mulf %37, %24 : vector<2x32xf32>
    %41 = arith.mulf %36, %38 : vector<2x32xf32>
    %42 = arith.addf %40, %41 : vector<2x32xf32>
    %43 = math.tanh %42 : vector<2x32xf32>
    %44 = arith.mulf %39, %43 : vector<2x32xf32>
    %45 = vector.extract_strided_slice %6 {offsets = [4, 0], sizes = [2, 128], strides = [1, 1]} : vector<16x128xf32> to vector<2x128xf32>
    %cst_13 = arith.constant dense<0.000000e+00> : vector<2x128xf32>
    %46 = tpu.matmul %44, %2, %cst_13 {dimension_numbers = #tpu.dot_dimension_numbers<[1], [0], [0], [1], [0, 0, 1, 1], [], []>} : vector<2x32xf32>, vector<32x128xf32>, vector<2x128xf32> -> vector<2x128xf32>
    %47 = arith.addf %45, %46 : vector<2x128xf32>
    %48 = arith.negf %47 : vector<2x128xf32>
    %49 = math.exp %48 : vector<2x128xf32>
    %cst_14 = arith.constant 1.000000e+00 : f32
    %50 = vector.broadcast %cst_14 : f32 to vector<2x128xf32>
    %51 = arith.addf %50, %49 : vector<2x128xf32>
    %52 = arith.divf %50, %51 : vector<2x128xf32>
    %53 = math.tanh %47 : vector<2x128xf32>
    %54 = vector.extract_strided_slice %52 {offsets = [0, 0], sizes = [2, 32], strides = [1, 1]} : vector<2x128xf32> to vector<2x32xf32>
    %55 = vector.extract_strided_slice %52 {offsets = [0, 32], sizes = [2, 32], strides = [1, 1]} : vector<2x128xf32> to vector<2x32xf32>
    %56 = vector.extract_strided_slice %53 {offsets = [0, 64], sizes = [2, 32], strides = [1, 1]} : vector<2x128xf32> to vector<2x32xf32>
    %57 = vector.extract_strided_slice %52 {offsets = [0, 96], sizes = [2, 32], strides = [1, 1]} : vector<2x128xf32> to vector<2x32xf32>
    %58 = arith.mulf %55, %42 : vector<2x32xf32>
    %59 = arith.mulf %54, %56 : vector<2x32xf32>
    %60 = arith.addf %58, %59 : vector<2x32xf32>
    %61 = math.tanh %60 : vector<2x32xf32>
    %62 = arith.mulf %57, %61 : vector<2x32xf32>
    %63 = vector.extract_strided_slice %6 {offsets = [6, 0], sizes = [2, 128], strides = [1, 1]} : vector<16x128xf32> to vector<2x128xf32>
    %cst_15 = arith.constant dense<0.000000e+00> : vector<2x128xf32>
    %64 = tpu.matmul %62, %2, %cst_15 {dimension_numbers = #tpu.dot_dimension_numbers<[1], [0], [0], [1], [0, 0, 1, 1], [], []>} : vector<2x32xf32>, vector<32x128xf32>, vector<2x128xf32> -> vector<2x128xf32>
    %65 = arith.addf %63, %64 : vector<2x128xf32>
    %66 = arith.negf %65 : vector<2x128xf32>
    %67 = math.exp %66 : vector<2x128xf32>
    %cst_16 = arith.constant 1.000000e+00 : f32
    %68 = vector.broadcast %cst_16 : f32 to vector<2x128xf32>
    %69 = arith.addf %68, %67 : vector<2x128xf32>
    %70 = arith.divf %68, %69 : vector<2x128xf32>
    %71 = math.tanh %65 : vector<2x128xf32>
    %72 = vector.extract_strided_slice %70 {offsets = [0, 0], sizes = [2, 32], strides = [1, 1]} : vector<2x128xf32> to vector<2x32xf32>
    %73 = vector.extract_strided_slice %70 {offsets = [0, 32], sizes = [2, 32], strides = [1, 1]} : vector<2x128xf32> to vector<2x32xf32>
    %74 = vector.extract_strided_slice %71 {offsets = [0, 64], sizes = [2, 32], strides = [1, 1]} : vector<2x128xf32> to vector<2x32xf32>
    %75 = vector.extract_strided_slice %70 {offsets = [0, 96], sizes = [2, 32], strides = [1, 1]} : vector<2x128xf32> to vector<2x32xf32>
    %76 = arith.mulf %73, %60 : vector<2x32xf32>
    %77 = arith.mulf %72, %74 : vector<2x32xf32>
    %78 = arith.addf %76, %77 : vector<2x32xf32>
    %79 = math.tanh %78 : vector<2x32xf32>
    %80 = arith.mulf %75, %79 : vector<2x32xf32>
    %81 = vector.extract_strided_slice %6 {offsets = [8, 0], sizes = [2, 128], strides = [1, 1]} : vector<16x128xf32> to vector<2x128xf32>
    %cst_17 = arith.constant dense<0.000000e+00> : vector<2x128xf32>
    %82 = tpu.matmul %80, %2, %cst_17 {dimension_numbers = #tpu.dot_dimension_numbers<[1], [0], [0], [1], [0, 0, 1, 1], [], []>} : vector<2x32xf32>, vector<32x128xf32>, vector<2x128xf32> -> vector<2x128xf32>
    %83 = arith.addf %81, %82 : vector<2x128xf32>
    %84 = arith.negf %83 : vector<2x128xf32>
    %85 = math.exp %84 : vector<2x128xf32>
    %cst_18 = arith.constant 1.000000e+00 : f32
    %86 = vector.broadcast %cst_18 : f32 to vector<2x128xf32>
    %87 = arith.addf %86, %85 : vector<2x128xf32>
    %88 = arith.divf %86, %87 : vector<2x128xf32>
    %89 = math.tanh %83 : vector<2x128xf32>
    %90 = vector.extract_strided_slice %88 {offsets = [0, 0], sizes = [2, 32], strides = [1, 1]} : vector<2x128xf32> to vector<2x32xf32>
    %91 = vector.extract_strided_slice %88 {offsets = [0, 32], sizes = [2, 32], strides = [1, 1]} : vector<2x128xf32> to vector<2x32xf32>
    %92 = vector.extract_strided_slice %89 {offsets = [0, 64], sizes = [2, 32], strides = [1, 1]} : vector<2x128xf32> to vector<2x32xf32>
    %93 = vector.extract_strided_slice %88 {offsets = [0, 96], sizes = [2, 32], strides = [1, 1]} : vector<2x128xf32> to vector<2x32xf32>
    %94 = arith.mulf %91, %78 : vector<2x32xf32>
    %95 = arith.mulf %90, %92 : vector<2x32xf32>
    %96 = arith.addf %94, %95 : vector<2x32xf32>
    %97 = math.tanh %96 : vector<2x32xf32>
    %98 = arith.mulf %93, %97 : vector<2x32xf32>
    %99 = vector.extract_strided_slice %6 {offsets = [10, 0], sizes = [2, 128], strides = [1, 1]} : vector<16x128xf32> to vector<2x128xf32>
    %cst_19 = arith.constant dense<0.000000e+00> : vector<2x128xf32>
    %100 = tpu.matmul %98, %2, %cst_19 {dimension_numbers = #tpu.dot_dimension_numbers<[1], [0], [0], [1], [0, 0, 1, 1], [], []>} : vector<2x32xf32>, vector<32x128xf32>, vector<2x128xf32> -> vector<2x128xf32>
    %101 = arith.addf %99, %100 : vector<2x128xf32>
    %102 = arith.negf %101 : vector<2x128xf32>
    %103 = math.exp %102 : vector<2x128xf32>
    %cst_20 = arith.constant 1.000000e+00 : f32
    %104 = vector.broadcast %cst_20 : f32 to vector<2x128xf32>
    %105 = arith.addf %104, %103 : vector<2x128xf32>
    %106 = arith.divf %104, %105 : vector<2x128xf32>
    %107 = math.tanh %101 : vector<2x128xf32>
    %108 = vector.extract_strided_slice %106 {offsets = [0, 0], sizes = [2, 32], strides = [1, 1]} : vector<2x128xf32> to vector<2x32xf32>
    %109 = vector.extract_strided_slice %106 {offsets = [0, 32], sizes = [2, 32], strides = [1, 1]} : vector<2x128xf32> to vector<2x32xf32>
    %110 = vector.extract_strided_slice %107 {offsets = [0, 64], sizes = [2, 32], strides = [1, 1]} : vector<2x128xf32> to vector<2x32xf32>
    %111 = vector.extract_strided_slice %106 {offsets = [0, 96], sizes = [2, 32], strides = [1, 1]} : vector<2x128xf32> to vector<2x32xf32>
    %112 = arith.mulf %109, %96 : vector<2x32xf32>
    %113 = arith.mulf %108, %110 : vector<2x32xf32>
    %114 = arith.addf %112, %113 : vector<2x32xf32>
    %115 = math.tanh %114 : vector<2x32xf32>
    %116 = arith.mulf %111, %115 : vector<2x32xf32>
    %117 = vector.extract_strided_slice %6 {offsets = [12, 0], sizes = [2, 128], strides = [1, 1]} : vector<16x128xf32> to vector<2x128xf32>
    %cst_21 = arith.constant dense<0.000000e+00> : vector<2x128xf32>
    %118 = tpu.matmul %116, %2, %cst_21 {dimension_numbers = #tpu.dot_dimension_numbers<[1], [0], [0], [1], [0, 0, 1, 1], [], []>} : vector<2x32xf32>, vector<32x128xf32>, vector<2x128xf32> -> vector<2x128xf32>
    %119 = arith.addf %117, %118 : vector<2x128xf32>
    %120 = arith.negf %119 : vector<2x128xf32>
    %121 = math.exp %120 : vector<2x128xf32>
    %cst_22 = arith.constant 1.000000e+00 : f32
    %122 = vector.broadcast %cst_22 : f32 to vector<2x128xf32>
    %123 = arith.addf %122, %121 : vector<2x128xf32>
    %124 = arith.divf %122, %123 : vector<2x128xf32>
    %125 = math.tanh %119 : vector<2x128xf32>
    %126 = vector.extract_strided_slice %124 {offsets = [0, 0], sizes = [2, 32], strides = [1, 1]} : vector<2x128xf32> to vector<2x32xf32>
    %127 = vector.extract_strided_slice %124 {offsets = [0, 32], sizes = [2, 32], strides = [1, 1]} : vector<2x128xf32> to vector<2x32xf32>
    %128 = vector.extract_strided_slice %125 {offsets = [0, 64], sizes = [2, 32], strides = [1, 1]} : vector<2x128xf32> to vector<2x32xf32>
    %129 = vector.extract_strided_slice %124 {offsets = [0, 96], sizes = [2, 32], strides = [1, 1]} : vector<2x128xf32> to vector<2x32xf32>
    %130 = arith.mulf %127, %114 : vector<2x32xf32>
    %131 = arith.mulf %126, %128 : vector<2x32xf32>
    %132 = arith.addf %130, %131 : vector<2x32xf32>
    %133 = math.tanh %132 : vector<2x32xf32>
    %134 = arith.mulf %129, %133 : vector<2x32xf32>
    %135 = vector.extract_strided_slice %6 {offsets = [14, 0], sizes = [2, 128], strides = [1, 1]} : vector<16x128xf32> to vector<2x128xf32>
    %cst_23 = arith.constant dense<0.000000e+00> : vector<2x128xf32>
    %136 = tpu.matmul %134, %2, %cst_23 {dimension_numbers = #tpu.dot_dimension_numbers<[1], [0], [0], [1], [0, 0, 1, 1], [], []>} : vector<2x32xf32>, vector<32x128xf32>, vector<2x128xf32> -> vector<2x128xf32>
    %137 = arith.addf %135, %136 : vector<2x128xf32>
    %138 = arith.negf %137 : vector<2x128xf32>
    %139 = math.exp %138 : vector<2x128xf32>
    %cst_24 = arith.constant 1.000000e+00 : f32
    %140 = vector.broadcast %cst_24 : f32 to vector<2x128xf32>
    %141 = arith.addf %140, %139 : vector<2x128xf32>
    %142 = arith.divf %140, %141 : vector<2x128xf32>
    %143 = math.tanh %137 : vector<2x128xf32>
    %144 = vector.extract_strided_slice %142 {offsets = [0, 0], sizes = [2, 32], strides = [1, 1]} : vector<2x128xf32> to vector<2x32xf32>
    %145 = vector.extract_strided_slice %142 {offsets = [0, 32], sizes = [2, 32], strides = [1, 1]} : vector<2x128xf32> to vector<2x32xf32>
    %146 = vector.extract_strided_slice %143 {offsets = [0, 64], sizes = [2, 32], strides = [1, 1]} : vector<2x128xf32> to vector<2x32xf32>
    %147 = vector.extract_strided_slice %142 {offsets = [0, 96], sizes = [2, 32], strides = [1, 1]} : vector<2x128xf32> to vector<2x32xf32>
    %148 = arith.mulf %145, %132 : vector<2x32xf32>
    %149 = arith.mulf %144, %146 : vector<2x32xf32>
    %150 = arith.addf %148, %149 : vector<2x32xf32>
    %151 = math.tanh %150 : vector<2x32xf32>
    %152 = arith.mulf %147, %151 : vector<2x32xf32>
    %153 = tpu.concatenate %26, %44, %62, %80, %98, %116, %134, %152 in 0 : vector<2x32xf32>, vector<2x32xf32>, vector<2x32xf32>, vector<2x32xf32>, vector<2x32xf32>, vector<2x32xf32>, vector<2x32xf32>, vector<2x32xf32> -> vector<16x32xf32>
    %c0_25 = arith.constant 0 : index
    %c0_26 = arith.constant 0 : index
    %154 = vector.load %arg4[%c0_25, %c0_26] : memref<32x128xf32, #tpu.memory_space<vmem>>, vector<32x128xf32>
    %c0_27 = arith.constant 0 : index
    %c0_28 = arith.constant 0 : index
    %155 = vector.load %arg5[%c0_27, %c0_28] : memref<32x128xf32, #tpu.memory_space<vmem>>, vector<32x128xf32>
    %c0_29 = arith.constant 0 : index
    %c0_30 = arith.constant 0 : index
    %156 = vector.load %arg6[%c0_29, %c0_30] : memref<1x128xf32, #tpu.memory_space<vmem>>, vector<1x128xf32>
    %cst_31 = arith.constant dense<0.000000e+00> : vector<16x128xf32>
    %157 = tpu.matmul %153, %154, %cst_31 {dimension_numbers = #tpu.dot_dimension_numbers<[1], [0], [0], [1], [0, 0, 1, 1], [], []>} : vector<16x32xf32>, vector<32x128xf32>, vector<16x128xf32> -> vector<16x128xf32>
    %158 = vector.broadcast %156 : vector<1x128xf32> to vector<16x128xf32>
    %159 = arith.addf %157, %158 : vector<16x128xf32>
    %cst_32 = arith.constant 0.000000e+00 : f32
    %160 = vector.broadcast %cst_32 : f32 to vector<2x32xf32>
    %cst_33 = arith.constant 0.000000e+00 : f32
    %161 = vector.broadcast %cst_33 : f32 to vector<2x32xf32>
    %162 = vector.extract_strided_slice %159 {offsets = [0, 0], sizes = [2, 128], strides = [1, 1]} : vector<16x128xf32> to vector<2x128xf32>
    %cst_34 = arith.constant dense<0.000000e+00> : vector<2x128xf32>
    %163 = tpu.matmul %160, %155, %cst_34 {dimension_numbers = #tpu.dot_dimension_numbers<[1], [0], [0], [1], [0, 0, 1, 1], [], []>} : vector<2x32xf32>, vector<32x128xf32>, vector<2x128xf32> -> vector<2x128xf32>
    %164 = arith.addf %162, %163 : vector<2x128xf32>
    %165 = arith.negf %164 : vector<2x128xf32>
    %166 = math.exp %165 : vector<2x128xf32>
    %cst_35 = arith.constant 1.000000e+00 : f32
    %167 = vector.broadcast %cst_35 : f32 to vector<2x128xf32>
    %168 = arith.addf %167, %166 : vector<2x128xf32>
    %169 = arith.divf %167, %168 : vector<2x128xf32>
    %170 = math.tanh %164 : vector<2x128xf32>
    %171 = vector.extract_strided_slice %169 {offsets = [0, 0], sizes = [2, 32], strides = [1, 1]} : vector<2x128xf32> to vector<2x32xf32>
    %172 = vector.extract_strided_slice %169 {offsets = [0, 32], sizes = [2, 32], strides = [1, 1]} : vector<2x128xf32> to vector<2x32xf32>
    %173 = vector.extract_strided_slice %170 {offsets = [0, 64], sizes = [2, 32], strides = [1, 1]} : vector<2x128xf32> to vector<2x32xf32>
    %174 = vector.extract_strided_slice %169 {offsets = [0, 96], sizes = [2, 32], strides = [1, 1]} : vector<2x128xf32> to vector<2x32xf32>
    %175 = arith.mulf %172, %161 : vector<2x32xf32>
    %176 = arith.mulf %171, %173 : vector<2x32xf32>
    %177 = arith.addf %175, %176 : vector<2x32xf32>
    %178 = math.tanh %177 : vector<2x32xf32>
    %179 = arith.mulf %174, %178 : vector<2x32xf32>
    %180 = vector.extract_strided_slice %159 {offsets = [2, 0], sizes = [2, 128], strides = [1, 1]} : vector<16x128xf32> to vector<2x128xf32>
    %cst_36 = arith.constant dense<0.000000e+00> : vector<2x128xf32>
    %181 = tpu.matmul %179, %155, %cst_36 {dimension_numbers = #tpu.dot_dimension_numbers<[1], [0], [0], [1], [0, 0, 1, 1], [], []>} : vector<2x32xf32>, vector<32x128xf32>, vector<2x128xf32> -> vector<2x128xf32>
    %182 = arith.addf %180, %181 : vector<2x128xf32>
    %183 = arith.negf %182 : vector<2x128xf32>
    %184 = math.exp %183 : vector<2x128xf32>
    %cst_37 = arith.constant 1.000000e+00 : f32
    %185 = vector.broadcast %cst_37 : f32 to vector<2x128xf32>
    %186 = arith.addf %185, %184 : vector<2x128xf32>
    %187 = arith.divf %185, %186 : vector<2x128xf32>
    %188 = math.tanh %182 : vector<2x128xf32>
    %189 = vector.extract_strided_slice %187 {offsets = [0, 0], sizes = [2, 32], strides = [1, 1]} : vector<2x128xf32> to vector<2x32xf32>
    %190 = vector.extract_strided_slice %187 {offsets = [0, 32], sizes = [2, 32], strides = [1, 1]} : vector<2x128xf32> to vector<2x32xf32>
    %191 = vector.extract_strided_slice %188 {offsets = [0, 64], sizes = [2, 32], strides = [1, 1]} : vector<2x128xf32> to vector<2x32xf32>
    %192 = vector.extract_strided_slice %187 {offsets = [0, 96], sizes = [2, 32], strides = [1, 1]} : vector<2x128xf32> to vector<2x32xf32>
    %193 = arith.mulf %190, %177 : vector<2x32xf32>
    %194 = arith.mulf %189, %191 : vector<2x32xf32>
    %195 = arith.addf %193, %194 : vector<2x32xf32>
    %196 = math.tanh %195 : vector<2x32xf32>
    %197 = arith.mulf %192, %196 : vector<2x32xf32>
    %198 = vector.extract_strided_slice %159 {offsets = [4, 0], sizes = [2, 128], strides = [1, 1]} : vector<16x128xf32> to vector<2x128xf32>
    %cst_38 = arith.constant dense<0.000000e+00> : vector<2x128xf32>
    %199 = tpu.matmul %197, %155, %cst_38 {dimension_numbers = #tpu.dot_dimension_numbers<[1], [0], [0], [1], [0, 0, 1, 1], [], []>} : vector<2x32xf32>, vector<32x128xf32>, vector<2x128xf32> -> vector<2x128xf32>
    %200 = arith.addf %198, %199 : vector<2x128xf32>
    %201 = arith.negf %200 : vector<2x128xf32>
    %202 = math.exp %201 : vector<2x128xf32>
    %cst_39 = arith.constant 1.000000e+00 : f32
    %203 = vector.broadcast %cst_39 : f32 to vector<2x128xf32>
    %204 = arith.addf %203, %202 : vector<2x128xf32>
    %205 = arith.divf %203, %204 : vector<2x128xf32>
    %206 = math.tanh %200 : vector<2x128xf32>
    %207 = vector.extract_strided_slice %205 {offsets = [0, 0], sizes = [2, 32], strides = [1, 1]} : vector<2x128xf32> to vector<2x32xf32>
    %208 = vector.extract_strided_slice %205 {offsets = [0, 32], sizes = [2, 32], strides = [1, 1]} : vector<2x128xf32> to vector<2x32xf32>
    %209 = vector.extract_strided_slice %206 {offsets = [0, 64], sizes = [2, 32], strides = [1, 1]} : vector<2x128xf32> to vector<2x32xf32>
    %210 = vector.extract_strided_slice %205 {offsets = [0, 96], sizes = [2, 32], strides = [1, 1]} : vector<2x128xf32> to vector<2x32xf32>
    %211 = arith.mulf %208, %195 : vector<2x32xf32>
    %212 = arith.mulf %207, %209 : vector<2x32xf32>
    %213 = arith.addf %211, %212 : vector<2x32xf32>
    %214 = math.tanh %213 : vector<2x32xf32>
    %215 = arith.mulf %210, %214 : vector<2x32xf32>
    %216 = vector.extract_strided_slice %159 {offsets = [6, 0], sizes = [2, 128], strides = [1, 1]} : vector<16x128xf32> to vector<2x128xf32>
    %cst_40 = arith.constant dense<0.000000e+00> : vector<2x128xf32>
    %217 = tpu.matmul %215, %155, %cst_40 {dimension_numbers = #tpu.dot_dimension_numbers<[1], [0], [0], [1], [0, 0, 1, 1], [], []>} : vector<2x32xf32>, vector<32x128xf32>, vector<2x128xf32> -> vector<2x128xf32>
    %218 = arith.addf %216, %217 : vector<2x128xf32>
    %219 = arith.negf %218 : vector<2x128xf32>
    %220 = math.exp %219 : vector<2x128xf32>
    %cst_41 = arith.constant 1.000000e+00 : f32
    %221 = vector.broadcast %cst_41 : f32 to vector<2x128xf32>
    %222 = arith.addf %221, %220 : vector<2x128xf32>
    %223 = arith.divf %221, %222 : vector<2x128xf32>
    %224 = math.tanh %218 : vector<2x128xf32>
    %225 = vector.extract_strided_slice %223 {offsets = [0, 0], sizes = [2, 32], strides = [1, 1]} : vector<2x128xf32> to vector<2x32xf32>
    %226 = vector.extract_strided_slice %223 {offsets = [0, 32], sizes = [2, 32], strides = [1, 1]} : vector<2x128xf32> to vector<2x32xf32>
    %227 = vector.extract_strided_slice %224 {offsets = [0, 64], sizes = [2, 32], strides = [1, 1]} : vector<2x128xf32> to vector<2x32xf32>
    %228 = vector.extract_strided_slice %223 {offsets = [0, 96], sizes = [2, 32], strides = [1, 1]} : vector<2x128xf32> to vector<2x32xf32>
    %229 = arith.mulf %226, %213 : vector<2x32xf32>
    %230 = arith.mulf %225, %227 : vector<2x32xf32>
    %231 = arith.addf %229, %230 : vector<2x32xf32>
    %232 = math.tanh %231 : vector<2x32xf32>
    %233 = arith.mulf %228, %232 : vector<2x32xf32>
    %234 = vector.extract_strided_slice %159 {offsets = [8, 0], sizes = [2, 128], strides = [1, 1]} : vector<16x128xf32> to vector<2x128xf32>
    %cst_42 = arith.constant dense<0.000000e+00> : vector<2x128xf32>
    %235 = tpu.matmul %233, %155, %cst_42 {dimension_numbers = #tpu.dot_dimension_numbers<[1], [0], [0], [1], [0, 0, 1, 1], [], []>} : vector<2x32xf32>, vector<32x128xf32>, vector<2x128xf32> -> vector<2x128xf32>
    %236 = arith.addf %234, %235 : vector<2x128xf32>
    %237 = arith.negf %236 : vector<2x128xf32>
    %238 = math.exp %237 : vector<2x128xf32>
    %cst_43 = arith.constant 1.000000e+00 : f32
    %239 = vector.broadcast %cst_43 : f32 to vector<2x128xf32>
    %240 = arith.addf %239, %238 : vector<2x128xf32>
    %241 = arith.divf %239, %240 : vector<2x128xf32>
    %242 = math.tanh %236 : vector<2x128xf32>
    %243 = vector.extract_strided_slice %241 {offsets = [0, 0], sizes = [2, 32], strides = [1, 1]} : vector<2x128xf32> to vector<2x32xf32>
    %244 = vector.extract_strided_slice %241 {offsets = [0, 32], sizes = [2, 32], strides = [1, 1]} : vector<2x128xf32> to vector<2x32xf32>
    %245 = vector.extract_strided_slice %242 {offsets = [0, 64], sizes = [2, 32], strides = [1, 1]} : vector<2x128xf32> to vector<2x32xf32>
    %246 = vector.extract_strided_slice %241 {offsets = [0, 96], sizes = [2, 32], strides = [1, 1]} : vector<2x128xf32> to vector<2x32xf32>
    %247 = arith.mulf %244, %231 : vector<2x32xf32>
    %248 = arith.mulf %243, %245 : vector<2x32xf32>
    %249 = arith.addf %247, %248 : vector<2x32xf32>
    %250 = math.tanh %249 : vector<2x32xf32>
    %251 = arith.mulf %246, %250 : vector<2x32xf32>
    %252 = vector.extract_strided_slice %159 {offsets = [10, 0], sizes = [2, 128], strides = [1, 1]} : vector<16x128xf32> to vector<2x128xf32>
    %cst_44 = arith.constant dense<0.000000e+00> : vector<2x128xf32>
    %253 = tpu.matmul %251, %155, %cst_44 {dimension_numbers = #tpu.dot_dimension_numbers<[1], [0], [0], [1], [0, 0, 1, 1], [], []>} : vector<2x32xf32>, vector<32x128xf32>, vector<2x128xf32> -> vector<2x128xf32>
    %254 = arith.addf %252, %253 : vector<2x128xf32>
    %255 = arith.negf %254 : vector<2x128xf32>
    %256 = math.exp %255 : vector<2x128xf32>
    %cst_45 = arith.constant 1.000000e+00 : f32
    %257 = vector.broadcast %cst_45 : f32 to vector<2x128xf32>
    %258 = arith.addf %257, %256 : vector<2x128xf32>
    %259 = arith.divf %257, %258 : vector<2x128xf32>
    %260 = math.tanh %254 : vector<2x128xf32>
    %261 = vector.extract_strided_slice %259 {offsets = [0, 0], sizes = [2, 32], strides = [1, 1]} : vector<2x128xf32> to vector<2x32xf32>
    %262 = vector.extract_strided_slice %259 {offsets = [0, 32], sizes = [2, 32], strides = [1, 1]} : vector<2x128xf32> to vector<2x32xf32>
    %263 = vector.extract_strided_slice %260 {offsets = [0, 64], sizes = [2, 32], strides = [1, 1]} : vector<2x128xf32> to vector<2x32xf32>
    %264 = vector.extract_strided_slice %259 {offsets = [0, 96], sizes = [2, 32], strides = [1, 1]} : vector<2x128xf32> to vector<2x32xf32>
    %265 = arith.mulf %262, %249 : vector<2x32xf32>
    %266 = arith.mulf %261, %263 : vector<2x32xf32>
    %267 = arith.addf %265, %266 : vector<2x32xf32>
    %268 = math.tanh %267 : vector<2x32xf32>
    %269 = arith.mulf %264, %268 : vector<2x32xf32>
    %270 = vector.extract_strided_slice %159 {offsets = [12, 0], sizes = [2, 128], strides = [1, 1]} : vector<16x128xf32> to vector<2x128xf32>
    %cst_46 = arith.constant dense<0.000000e+00> : vector<2x128xf32>
    %271 = tpu.matmul %269, %155, %cst_46 {dimension_numbers = #tpu.dot_dimension_numbers<[1], [0], [0], [1], [0, 0, 1, 1], [], []>} : vector<2x32xf32>, vector<32x128xf32>, vector<2x128xf32> -> vector<2x128xf32>
    %272 = arith.addf %270, %271 : vector<2x128xf32>
    %273 = arith.negf %272 : vector<2x128xf32>
    %274 = math.exp %273 : vector<2x128xf32>
    %cst_47 = arith.constant 1.000000e+00 : f32
    %275 = vector.broadcast %cst_47 : f32 to vector<2x128xf32>
    %276 = arith.addf %275, %274 : vector<2x128xf32>
    %277 = arith.divf %275, %276 : vector<2x128xf32>
    %278 = math.tanh %272 : vector<2x128xf32>
    %279 = vector.extract_strided_slice %277 {offsets = [0, 0], sizes = [2, 32], strides = [1, 1]} : vector<2x128xf32> to vector<2x32xf32>
    %280 = vector.extract_strided_slice %277 {offsets = [0, 32], sizes = [2, 32], strides = [1, 1]} : vector<2x128xf32> to vector<2x32xf32>
    %281 = vector.extract_strided_slice %278 {offsets = [0, 64], sizes = [2, 32], strides = [1, 1]} : vector<2x128xf32> to vector<2x32xf32>
    %282 = vector.extract_strided_slice %277 {offsets = [0, 96], sizes = [2, 32], strides = [1, 1]} : vector<2x128xf32> to vector<2x32xf32>
    %283 = arith.mulf %280, %267 : vector<2x32xf32>
    %284 = arith.mulf %279, %281 : vector<2x32xf32>
    %285 = arith.addf %283, %284 : vector<2x32xf32>
    %286 = math.tanh %285 : vector<2x32xf32>
    %287 = arith.mulf %282, %286 : vector<2x32xf32>
    %288 = vector.extract_strided_slice %159 {offsets = [14, 0], sizes = [2, 128], strides = [1, 1]} : vector<16x128xf32> to vector<2x128xf32>
    %cst_48 = arith.constant dense<0.000000e+00> : vector<2x128xf32>
    %289 = tpu.matmul %287, %155, %cst_48 {dimension_numbers = #tpu.dot_dimension_numbers<[1], [0], [0], [1], [0, 0, 1, 1], [], []>} : vector<2x32xf32>, vector<32x128xf32>, vector<2x128xf32> -> vector<2x128xf32>
    %290 = arith.addf %288, %289 : vector<2x128xf32>
    %291 = arith.negf %290 : vector<2x128xf32>
    %292 = math.exp %291 : vector<2x128xf32>
    %cst_49 = arith.constant 1.000000e+00 : f32
    %293 = vector.broadcast %cst_49 : f32 to vector<2x128xf32>
    %294 = arith.addf %293, %292 : vector<2x128xf32>
    %295 = arith.divf %293, %294 : vector<2x128xf32>
    %296 = math.tanh %290 : vector<2x128xf32>
    %297 = vector.extract_strided_slice %295 {offsets = [0, 0], sizes = [2, 32], strides = [1, 1]} : vector<2x128xf32> to vector<2x32xf32>
    %298 = vector.extract_strided_slice %295 {offsets = [0, 32], sizes = [2, 32], strides = [1, 1]} : vector<2x128xf32> to vector<2x32xf32>
    %299 = vector.extract_strided_slice %296 {offsets = [0, 64], sizes = [2, 32], strides = [1, 1]} : vector<2x128xf32> to vector<2x32xf32>
    %300 = vector.extract_strided_slice %295 {offsets = [0, 96], sizes = [2, 32], strides = [1, 1]} : vector<2x128xf32> to vector<2x32xf32>
    %301 = arith.mulf %298, %285 : vector<2x32xf32>
    %302 = arith.mulf %297, %299 : vector<2x32xf32>
    %303 = arith.addf %301, %302 : vector<2x32xf32>
    %304 = math.tanh %303 : vector<2x32xf32>
    %305 = arith.mulf %300, %304 : vector<2x32xf32>
    %c0_50 = arith.constant 0 : index
    %c0_51 = arith.constant 0 : index
    %306 = vector.load %arg7[%c0_50, %c0_51] : memref<32x3xf32, #tpu.memory_space<vmem>>, vector<32x3xf32>
    %cst_52 = arith.constant dense<0.000000e+00> : vector<2x3xf32>
    %307 = tpu.matmul %305, %306, %cst_52 {dimension_numbers = #tpu.dot_dimension_numbers<[1], [0], [0], [1], [0, 0, 1, 1], [], []>} : vector<2x32xf32>, vector<32x3xf32>, vector<2x3xf32> -> vector<2x3xf32>
    %c0_53 = arith.constant 0 : index
    %c0_54 = arith.constant 0 : index
    %308 = vector.load %arg8[%c0_53, %c0_54] : memref<1x3xf32, #tpu.memory_space<vmem>>, vector<1x3xf32>
    %309 = vector.broadcast %308 : vector<1x3xf32> to vector<2x3xf32>
    %310 = arith.addf %307, %309 : vector<2x3xf32>
    %c0_55 = arith.constant 0 : index
    %c0_56 = arith.constant 0 : index
    %311 = vector.load %arg9[%c0_55, %c0_56] : memref<2x3xf32, #tpu.memory_space<vmem>>, vector<2x3xf32>
    tpu.vector_store %arg9[%c0_55, %c0_56], %310 {strides = array<i32>} : memref<2x3xf32, #tpu.memory_space<vmem>>, vector<2x3xf32>,
    return
  }
}

</mosaic_0001>

<llo_original>
// kernel: tpu_custom_call.1
$region0: #{tpu_custom_call.1}
  #allocation0 [shape = 'u32[]', space=smem, size = 0x4, offset = 0x4, fixed_abs, tag = 'smem constant byte address 0x4 - core index']
  #allocation1 [shape = 'u32[144,128]{1,0:T(1,128)}', space=vmem, size = 0x12000, scoped, tag = 'internal scratch']
  %s0 = inlined_call_operand.vmem [shape: f32[16,3], index: 0, kind: input, shape index: {}]
  %s1 = inlined_call_operand.hbm [shape: f32[3,128], index: 1, kind: input, shape index: {}]
  %s2 = inlined_call_operand.vmem [shape: f32[32,128], index: 2, kind: input, shape index: {}]
  %s3 = inlined_call_operand.vmem [shape: f32[1,128], index: 3, kind: input, shape index: {}]
  %s4 = inlined_call_operand.vmem [shape: f32[32,128], index: 4, kind: input, shape index: {}]
  %s5 = inlined_call_operand.hbm [shape: f32[32,128], index: 5, kind: input, shape index: {}]
  %s6 = inlined_call_operand.vmem [shape: f32[1,128], index: 6, kind: input, shape index: {}]
  %s7 = inlined_call_operand.vmem [shape: f32[32,3], index: 7, kind: input, shape index: {}]
  %s8 = inlined_call_operand.vmem [shape: f32[1,3], index: 8, kind: input, shape index: {}]
  %s9 = inlined_call_operand.hbm [shape: f32[2,3], index: 9, kind: output, shape index: {}]
  %s10 = sld [smem:[#allocation0]]
  $region54: #{tpu_custom_call.1} parent=0
    _
  %s12 = ssub.s32 1, %s10
  %s13 = scalar_select 0, %s12, %s10
  $region1: #{tpu_custom_call.1} parent=0
    #allocation2 [shape = 'u8[2048]{0}', space=vmem, size = 0x800, scoped, tag = 'input window, operand 1, single buffered']
    #allocation3 [shape = 's32[1]{0}', space=sflag, size = 0x4, scoped, tag = 'scoped memory for tpu_custom_call.1']
    #allocation4 [shape = 's32[1]{0}', space=sflag, size = 0x4, scoped, tag = 'scoped memory for tpu_custom_call.1']
    #allocation5 [shape = 'u8[16384]{0}', space=vmem, size = 0x4000, scoped, tag = 'input window, operand 5, single buffered']
    #allocation6 [shape = 's32[1]{0}', space=sflag, size = 0x4, scoped, tag = 'scoped memory for tpu_custom_call.1']
    #allocation7 [shape = 'u8[1024]{0}', space=vmem, size = 0x400, scoped, tag = 'output window, operand 0, single buffered']
    %14 = vsyncpa [#allocation3], 0
    %15 = vsyncpa [#allocation6], 0
    %16 = vsyncpa [#allocation4], 0
    // Predicated region
    $region2: #{tpu_custom_call.1} parent=1 // pred_check
      _
    $region3: #{tpu_custom_call.1} parent=1 // pred_check_branch
      %18 = sbr.rel (0) target = $region5
    $region4: #{tpu_custom_call.1} parent=1 // pred_region
      _
    $region5: #{tpu_custom_call.1} parent=1 // pred_fallthru
      _
    // Predicated region
    $region6: #{tpu_custom_call.1} parent=1 // pred_check
      _
    $region7: #{tpu_custom_call.1} parent=1 // pred_check_branch
      %20 = sbr.rel (0) target = $region9
    $region8: #{tpu_custom_call.1} parent=1 // pred_region
      %s22 = ssub.s32 64, 64
      %23 = vsyncadd [#allocation3], %s22
      %s25 = sshll.u32 [#allocation2], 4
      %s26 = int_to_ptr.vmem [resolvable:$true] %s25
      %28 = dma.hbm_to_vmem [thread:$0]  %s1, 64, %s26, [#allocation3]
    $region9: #{tpu_custom_call.1} parent=1 // pred_fallthru
      _
    // Predicated region
    $region10: #{tpu_custom_call.1} parent=1 // pred_check
      _
    $region11: #{tpu_custom_call.1} parent=1 // pred_check_branch
      %30 = sbr.rel (0) target = $region13
    $region12: #{tpu_custom_call.1} parent=1 // pred_region
      _
    $region13: #{tpu_custom_call.1} parent=1 // pred_fallthru
      _
    // Predicated region
    $region14: #{tpu_custom_call.1} parent=1 // pred_check
      _
    $region15: #{tpu_custom_call.1} parent=1 // pred_check_branch
      %32 = sbr.rel (0) target = $region17
    $region16: #{tpu_custom_call.1} parent=1 // pred_region
      _
    $region17: #{tpu_custom_call.1} parent=1 // pred_fallthru
      _
    // Predicated region
    $region18: #{tpu_custom_call.1} parent=1 // pred_check
      _
    $region19: #{tpu_custom_call.1} parent=1 // pred_check_branch
      %34 = sbr.rel (0) target = $region21
    $region20: #{tpu_custom_call.1} parent=1 // pred_region
      _
    $region21: #{tpu_custom_call.1} parent=1 // pred_fallthru
      _
    // Predicated region
    $region22: #{tpu_custom_call.1} parent=1 // pred_check
      _
    $region23: #{tpu_custom_call.1} parent=1 // pred_check_branch
      %36 = sbr.rel (0) target = $region25
    $region24: #{tpu_custom_call.1} parent=1 // pred_region
      %s38 = ssub.s32 512, 512
      %39 = vsyncadd [#allocation6], %s38
      %s40 = sshll.u32 [#allocation5], 4
      %s41 = int_to_ptr.vmem [resolvable:$true] %s40
      %46 = dma.hbm_to_vmem [thread:$0]  %s5, 512, %s41, [#allocation6], 128, 128, 8
    $region25: #{tpu_custom_call.1} parent=1 // pred_fallthru
      _
    // Predicated region
    $region26: #{tpu_custom_call.1} parent=1 // pred_check
      _
    $region27: #{tpu_custom_call.1} parent=1 // pred_check_branch
      %48 = sbr.rel (0) target = $region29
    $region28: #{tpu_custom_call.1} parent=1 // pred_region
      _
    $region29: #{tpu_custom_call.1} parent=1 // pred_fallthru
      _
    // Predicated region
    $region30: #{tpu_custom_call.1} parent=1 // pred_check
      _
    $region31: #{tpu_custom_call.1} parent=1 // pred_check_branch
      %50 = sbr.rel (0) target = $region33
    $region32: #{tpu_custom_call.1} parent=1 // pred_region
      _
    $region33: #{tpu_custom_call.1} parent=1 // pred_fallthru
      _
    // Predicated region
    $region34: #{tpu_custom_call.1} parent=1 // pred_check
      _
    $region35: #{tpu_custom_call.1} parent=1 // pred_check_branch
      %52 = sbr.rel (0) target = $region37
    $region36: #{tpu_custom_call.1} parent=1 // pred_region
      _
    $region37: #{tpu_custom_call.1} parent=1 // pred_fallthru
      _
    // Predicated region
    $region38: #{tpu_custom_call.1} parent=1 // pred_check
      _
    $region39: #{tpu_custom_call.1} parent=1 // pred_check_branch
      %54 = sbr.rel (0) target = $region41
    $region40: #{tpu_custom_call.1} parent=1 // pred_region
      %55 = dma.done [#allocation3], 64
    $region41: #{tpu_custom_call.1} parent=1 // pred_fallthru
      _
    // Predicated region
    $region42: #{tpu_custom_call.1} parent=1 // pred_check
      _
    $region43: #{tpu_custom_call.1} parent=1 // pred_check_branch
      %57 = sbr.rel (0) target = $region45
    $region44: #{tpu_custom_call.1} parent=1 // pred_region
      %58 = dma.done [#allocation6], 512
    $region45: #{tpu_custom_call.1} parent=1 // pred_fallthru
      _
    %v59 = vld [vmem:[%s0] sm:$0xff]
    %v60 = vld [vmem:[%s0 + $0x8] sm:$0xff]
    %v61 = vld [vmem:[#allocation2] sm:$0x7]
    %v62 = vld [vmem:[%s2] sm:$0xff]
    %v63 = vld [vmem:[%s2 + $0x8] sm:$0xff]
    %v64 = vld [vmem:[%s2 + $0x10] sm:$0xff]
    %v65 = vld [vmem:[%s2 + $0x18] sm:$0xff]
    %v66 = vld [vmem:[%s3] sm:$0x1]
    %v68 = vlaneseq
    %v69 = vshrl.u32 %v68, 7
    %v70 = vsub.s32 0, %v69
    %v71 = vrot.slane %v66, %v70
    %vm73 = vcmask 23552
    %v75 = vsel %vm73, %v59, 0
    %v78 = vsel %vm73, %v60, 0
    %vm80 = vcmask 1042432
    %v82 = vsel %vm80, %v61, 0
    %84 = vmatprep.subr.mxu0 0.0
    %85 = vmatpush1.msra.mxu0 %v82
    %86 = vmatprep.subr.mxu0 0.0
    %87 = vmatpush1.msra.mxu0 0.0
    %88 = vmatprep.subr.mxu0 0.0
    %89 = vmatpush1.msra.mxu0 0.0
    %90 = vmatprep.subr.mxu0 0.0
    %91 = vmatpush1.msra.mxu0 0.0
    %92 = vmatprep.subr.mxu0 0.0
    %93 = vmatpush1.msra.mxu0 0.0
    %94 = vmatprep.subr.mxu0 0.0
    %95 = vmatpush1.msra.mxu0 0.0
    %96 = vmatprep.subr.mxu0 0.0
    %97 = vmatpush1.msra.mxu0 0.0
    %98 = vmatprep.subr.mxu0 0.0
    %99 = vmatpush1.msra.mxu0 0.0
    %100 = vmatprep.subr.mxu0 0.0
    %101 = vmatpush1.msra.mxu0 0.0
    %102 = vmatprep.subr.mxu0 0.0
    %103 = vmatpush1.msra.mxu0 0.0
    %104 = vmatprep.subr.mxu0 0.0
    %105 = vmatpush1.msra.mxu0 0.0
    %106 = vmatprep.subr.mxu0 0.0
    %107 = vmatpush1.msra.mxu0 0.0
    %108 = vmatprep.subr.mxu0 0.0
    %109 = vmatpush1.msra.mxu0 0.0
    %110 = vmatprep.subr.mxu0 0.0
    %111 = vmatpush1.msra.mxu0 0.0
    %112 = vmatprep.subr.mxu0 0.0
    %113 = vmatpush1.msra.mxu0 0.0
    %114 = vmatprep.subr.mxu0 0.0
    %115 = vmatpush1.msra.mxu0 0.0
    %116 = vmatprep.subr.mxu0 0.0
    %117 = vmatpush1.msra.mxu0 0.0
    %118 = vmatprep.subr.mxu0 0.0
    %119 = vmatpush1.msra.mxu0 0.0
    %120 = vmatprep.subr.mxu0 0.0
    %121 = vmatpush1.msra.mxu0 0.0
    %122 = vmatprep.subr.mxu0 0.0
    %123 = vmatpush1.msra.mxu0 0.0
    %124 = vmatprep.subr.mxu0 0.0
    %125 = vmatpush1.msra.mxu0 0.0
    %126 = vmatprep.subr.mxu0 0.0
    %127 = vmatpush1.msra.mxu0 0.0
    %128 = vmatprep.subr.mxu0 0.0
    %129 = vmatpush1.msra.mxu0 0.0
    %130 = vmatprep.subr.mxu0 0.0
    %131 = vmatpush1.msra.mxu0 0.0
    %132 = vmatprep.subr.mxu0 0.0
    %133 = vmatpush1.msra.mxu0 0.0
    %134 = vmatprep.subr.mxu0 0.0
    %135 = vmatpush1.msra.mxu0 0.0
    %136 = vmatprep.subr.mxu0 0.0
    %137 = vmatpush1.msra.mxu0 0.0
    %138 = vmatprep.subr.mxu0 0.0
    %139 = vmatpush1.msra.mxu0 0.0
    %140 = vmatprep.subr.mxu0 0.0
    %141 = vmatpush1.msra.mxu0 0.0
    %142 = vmatprep.subr.mxu0 0.0
    %143 = vmatpush1.msra.mxu0 0.0
    %144 = vmatprep.subr.mxu0 0.0
    %145 = vmatpush1.msra.mxu0 0.0
    %146 = vmatprep.subr.mxu0 0.0
    %147 = vmatpush1.msra.mxu0 0.0
    %148 = vmatprep.mubr.f32.mxu0 0.0
    %149 = vmatmul.mubr.f32.gmra.mrb[0].mxu0 %v75
    %v150 = vpop.f32.mrb[0].mxu0
    %v151 = vadd.f32 %v71, %v150
    %v152 = vpop.f32.mrb[0].mxu0
    %153 = vmatprep.mubr.f32.mxu0 0.0
    %154 = vmatmul.mubr.f32.gmra.mrb[0].mxu0 %v78
    %v155 = vpop.f32.mrb[0].mxu0
    %v156 = vadd.f32 %v71, %v155
    %v157 = vpop.f32.mrb[0].mxu0
    %158 = vdwg.mxu0
    %vm159 = vcmask 261120
    %v161 = vsel %vm159, 0.0, 0
    %163 = vmatprep.subr.mxu0 0.0
    %164 = vmatpush1.msra.mxu0 %v62
    %165 = vmatprep.subr.mxu0 0.0
    %166 = vmatpush1.msra.mxu0 %v63
    %167 = vmatprep.subr.mxu0 0.0
    %168 = vmatpush1.msra.mxu0 %v64
    %169 = vmatprep.subr.mxu0 0.0
    %170 = vmatpush1.msra.mxu0 %v65
    %171 = vmatprep.subr.mxu0 0.0
    %172 = vmatpush1.msra.mxu0 0.0
    %173 = vmatprep.subr.mxu0 0.0
    %174 = vmatpush1.msra.mxu0 0.0
    %175 = vmatprep.subr.mxu0 0.0
    %176 = vmatpush1.msra.mxu0 0.0
    %177 = vmatprep.subr.mxu0 0.0
    %178 = vmatpush1.msra.mxu0 0.0
    %179 = vmatprep.subr.mxu0 0.0
    %180 = vmatpush1.msra.mxu0 0.0
    %181 = vmatprep.subr.mxu0 0.0
    %182 = vmatpush1.msra.mxu0 0.0
    %183 = vmatprep.subr.mxu0 0.0
    %184 = vmatpush1.msra.mxu0 0.0
    %185 = vmatprep.subr.mxu0 0.0
    %186 = vmatpush1.msra.mxu0 0.0
    %187 = vmatprep.subr.mxu0 0.0
    %188 = vmatpush1.msra.mxu0 0.0
    %189 = vmatprep.subr.mxu0 0.0
    %190 = vmatpush1.msra.mxu0 0.0
    %191 = vmatprep.subr.mxu0 0.0
    %192 = vmatpush1.msra.mxu0 0.0
    %193 = vmatprep.subr.mxu0 0.0
    %194 = vmatpush1.msra.mxu0 0.0
    %195 = vmatprep.subr.mxu0 0.0
    %196 = vmatpush1.msra.mxu0 0.0
    %197 = vmatprep.subr.mxu0 0.0
    %198 = vmatpush1.msra.mxu0 0.0
    %199 = vmatprep.subr.mxu0 0.0
    %200 = vmatpush1.msra.mxu0 0.0
    %201 = vmatprep.subr.mxu0 0.0
    %202 = vmatpush1.msra.mxu0 0.0
    %203 = vmatprep.subr.mxu0 0.0
    %204 = vmatpush1.msra.mxu0 0.0
    %205 = vmatprep.subr.mxu0 0.0
    %206 = vmatpush1.msra.mxu0 0.0
    %207 = vmatprep.subr.mxu0 0.0
    %208 = vmatpush1.msra.mxu0 0.0
    %209 = vmatprep.subr.mxu0 0.0
    %210 = vmatpush1.msra.mxu0 0.0
    %211 = vmatprep.subr.mxu0 0.0
    %212 = vmatpush1.msra.mxu0 0.0
    %213 = vmatprep.subr.mxu0 0.0
    %214 = vmatpush1.msra.mxu0 0.0
    %215 = vmatprep.subr.mxu0 0.0
    %216 = vmatpush1.msra.mxu0 0.0
    %217 = vmatprep.subr.mxu0 0.0
    %218 = vmatpush1.msra.mxu0 0.0
    %219 = vmatprep.subr.mxu0 0.0
    %220 = vmatpush1.msra.mxu0 0.0
    %221 = vmatprep.subr.mxu0 0.0
    %222 = vmatpush1.msra.mxu0 0.0
    %223 = vmatprep.subr.mxu0 0.0
    %224 = vmatpush1.msra.mxu0 0.0
    %225 = vmatprep.subr.mxu0 0.0
    %226 = vmatpush1.msra.mxu0 0.0
    %227 = vmatprep.mubr.f32.mxu0 0.0
    %228 = vmatmul.mubr.f32.gmra.mrb[0].mxu0 %v161
    %v229 = vpop.f32.mrb[0].mxu0
    %v230 = vadd.f32 0.0, %v229
    %v231 = vpop.f32.mrb[0].mxu0
    %232 = vdwg.mxu0
    %v233 = vadd.f32 %v151, %v230
    %v234 = vxor.u32 %v233, 2147483648
    %v235 = vmul.f32 %v234, 1.442695
    %v236 = vpow.pop %v235
    %v237 = vadd.f32 %v236, 1.0
    %v238 = vrcp.pop %v237
    %v239 = vmul.f32 1.0, %v238
    %v240 = vtanh.pop %v233
    %v241 = vmul.f32 %v239, 0.0
    %243 = vrot.lane.b32.xlu0 %v240, 64
    %v244 = vpop.permute.xlu0 %243
    %v246 = vmul.f32 %v239, %v244
    %248 = vrot.lane.b32.xlu0 %v246, 32
    %v249 = vpop.permute.xlu0 %248
    %v251 = vadd.f32 %v241, %v249
    %v252 = vtanh.pop %v251
    %254 = vrot.lane.b32.xlu0 %v252, 64
    %v255 = vpop.permute.xlu0 %254
    %v257 = vmul.f32 %v239, %v255
    %259 = vrot.lane.b32.xlu0 %v257, 32
    %v260 = vpop.permute.xlu0 %259
    %v261 = vsel %vm159, %v260, 0
    %263 = vmatprep.subr.mxu0 0.0
    %264 = vmatpush1.msra.mxu0 %v62
    %265 = vmatprep.subr.mxu0 0.0
    %266 = vmatpush1.msra.mxu0 %v63
    %267 = vmatprep.subr.mxu0 0.0
    %268 = vmatpush1.msra.mxu0 %v64
    %269 = vmatprep.subr.mxu0 0.0
    %270 = vmatpush1.msra.mxu0 %v65
    %271 = vmatprep.subr.mxu0 0.0
    %272 = vmatpush1.msra.mxu0 0.0
    %273 = vmatprep.subr.mxu0 0.0
    %274 = vmatpush1.msra.mxu0 0.0
    %275 = vmatprep.subr.mxu0 0.0
    %276 = vmatpush1.msra.mxu0 0.0
    %277 = vmatprep.subr.mxu0 0.0
    %278 = vmatpush1.msra.mxu0 0.0
    %279 = vmatprep.subr.mxu0 0.0
    %280 = vmatpush1.msra.mxu0 0.0
    %281 = vmatprep.subr.mxu0 0.0
    %282 = vmatpush1.msra.mxu0 0.0
    %283 = vmatprep.subr.mxu0 0.0
    %284 = vmatpush1.msra.mxu0 0.0
    %285 = vmatprep.subr.mxu0 0.0
    %286 = vmatpush1.msra.mxu0 0.0
    %287 = vmatprep.subr.mxu0 0.0
    %288 = vmatpush1.msra.mxu0 0.0
    %289 = vmatprep.subr.mxu0 0.0
    %290 = vmatpush1.msra.mxu0 0.0
    %291 = vmatprep.subr.mxu0 0.0
    %292 = vmatpush1.msra.mxu0 0.0
    %293 = vmatprep.subr.mxu0 0.0
    %294 = vmatpush1.msra.mxu0 0.0
    %295 = vmatprep.subr.mxu0 0.0
    %296 = vmatpush1.msra.mxu0 0.0
    %297 = vmatprep.subr.mxu0 0.0
    %298 = vmatpush1.msra.mxu0 0.0
    %299 = vmatprep.subr.mxu0 0.0
    %300 = vmatpush1.msra.mxu0 0.0
    %301 = vmatprep.subr.mxu0 0.0
    %302 = vmatpush1.msra.mxu0 0.0
    %303 = vmatprep.subr.mxu0 0.0
    %304 = vmatpush1.msra.mxu0 0.0
    %305 = vmatprep.subr.mxu0 0.0
    %306 = vmatpush1.msra.mxu0 0.0
    %307 = vmatprep.subr.mxu0 0.0
    %308 = vmatpush1.msra.mxu0 0.0
    %309 = vmatprep.subr.mxu0 0.0
    %310 = vmatpush1.msra.mxu0 0.0
    %311 = vmatprep.subr.mxu0 0.0
    %312 = vmatpush1.msra.mxu0 0.0
    %313 = vmatprep.subr.mxu0 0.0
    %314 = vmatpush1.msra.mxu0 0.0
    %315 = vmatprep.subr.mxu0 0.0
    %316 = vmatpush1.msra.mxu0 0.0
    %317 = vmatprep.subr.mxu0 0.0
    %318 = vmatpush1.msra.mxu0 0.0
    %319 = vmatprep.subr.mxu0 0.0
    %320 = vmatpush1.msra.mxu0 0.0
    %321 = vmatprep.subr.mxu0 0.0
    %322 = vmatpush1.msra.mxu0 0.0
    %323 = vmatprep.subr.mxu0 0.0
    %324 = vmatpush1.msra.mxu0 0.0
    %325 = vmatprep.subr.mxu0 0.0
    %326 = vmatpush1.msra.mxu0 0.0
    %327 = vmatprep.mubr.f32.mxu0 0.0
    %328 = vmatmul.mubr.f32.gmra.mrb[0].mxu0 %v261
    %v329 = vpop.f32.mrb[0].mxu0
    %v330 = vadd.f32 0.0, %v329
    %v331 = vpop.f32.mrb[0].mxu0
    %332 = vdwg.mxu0
    %v334 = vrot.slane %v330, 6
    %v336 = vadd.f32 %v151, %v334
    %v337 = vxor.u32 %v336, 2147483648
    %v338 = vmul.f32 %v337, 1.442695
    %v339 = vpow.pop %v338
    %v340 = vadd.f32 %v339, 1.0
    %v341 = vrcp.pop %v340
    %v342 = vmul.f32 1.0, %v341
    %v343 = vtanh.pop %v336
    %v345 = vrot.slane %v251, 6
    %v347 = vmul.f32 %v342, %v345
    %349 = vrot.lane.b32.xlu0 %v343, 64
    %v350 = vpop.permute.xlu0 %349
    %v352 = vmul.f32 %v342, %v350
    %354 = vrot.lane.b32.xlu0 %v352, 32
    %v355 = vpop.permute.xlu0 %354
    %v357 = vadd.f32 %v347, %v355
    %v358 = vtanh.pop %v357
    %360 = vrot.lane.b32.xlu0 %v358, 64
    %v361 = vpop.permute.xlu0 %360
    %v363 = vmul.f32 %v342, %v361
    %v365 = vrot.slane %v363, 2
    %366 = vrot.lane.b32.xlu0 %v365, 32
    %v367 = vpop.permute.xlu0 %366
    %v368 = vsel %vm159, %v367, 0
    %370 = vmatprep.subr.mxu0 0.0
    %371 = vmatpush1.msra.mxu0 %v62
    %372 = vmatprep.subr.mxu0 0.0
    %373 = vmatpush1.msra.mxu0 %v63
    %374 = vmatprep.subr.mxu0 0.0
    %375 = vmatpush1.msra.mxu0 %v64
    %376 = vmatprep.subr.mxu0 0.0
    %377 = vmatpush1.msra.mxu0 %v65
    %378 = vmatprep.subr.mxu0 0.0
    %379 = vmatpush1.msra.mxu0 0.0
    %380 = vmatprep.subr.mxu0 0.0
    %381 = vmatpush1.msra.mxu0 0.0
    %382 = vmatprep.subr.mxu0 0.0
    %383 = vmatpush1.msra.mxu0 0.0
    %384 = vmatprep.subr.mxu0 0.0
    %385 = vmatpush1.msra.mxu0 0.0
    %386 = vmatprep.subr.mxu0 0.0
    %387 = vmatpush1.msra.mxu0 0.0
    %388 = vmatprep.subr.mxu0 0.0
    %389 = vmatpush1.msra.mxu0 0.0
    %390 = vmatprep.subr.mxu0 0.0
    %391 = vmatpush1.msra.mxu0 0.0
    %392 = vmatprep.subr.mxu0 0.0
    %393 = vmatpush1.msra.mxu0 0.0
    %394 = vmatprep.subr.mxu0 0.0
    %395 = vmatpush1.msra.mxu0 0.0
    %396 = vmatprep.subr.mxu0 0.0
    %397 = vmatpush1.msra.mxu0 0.0
    %398 = vmatprep.subr.mxu0 0.0
    %399 = vmatpush1.msra.mxu0 0.0
    %400 = vmatprep.subr.mxu0 0.0
    %401 = vmatpush1.msra.mxu0 0.0
    %402 = vmatprep.subr.mxu0 0.0
    %403 = vmatpush1.msra.mxu0 0.0
    %404 = vmatprep.subr.mxu0 0.0
    %405 = vmatpush1.msra.mxu0 0.0
    %406 = vmatprep.subr.mxu0 0.0
    %407 = vmatpush1.msra.mxu0 0.0
    %408 = vmatprep.subr.mxu0 0.0
    %409 = vmatpush1.msra.mxu0 0.0
    %410 = vmatprep.subr.mxu0 0.0
    %411 = vmatpush1.msra.mxu0 0.0
    %412 = vmatprep.subr.mxu0 0.0
    %413 = vmatpush1.msra.mxu0 0.0
    %414 = vmatprep.subr.mxu0 0.0
    %415 = vmatpush1.msra.mxu0 0.0
    %416 = vmatprep.subr.mxu0 0.0
    %417 = vmatpush1.msra.mxu0 0.0
    %418 = vmatprep.subr.mxu0 0.0
    %419 = vmatpush1.msra.mxu0 0.0
    %420 = vmatprep.subr.mxu0 0.0
    %421 = vmatpush1.msra.mxu0 0.0
    %422 = vmatprep.subr.mxu0 0.0
    %423 = vmatpush1.msra.mxu0 0.0
    %424 = vmatprep.subr.mxu0 0.0
    %425 = vmatpush1.msra.mxu0 0.0
    %426 = vmatprep.subr.mxu0 0.0
    %427 = vmatpush1.msra.mxu0 0.0
    %428 = vmatprep.subr.mxu0 0.0
    %429 = vmatpush1.msra.mxu0 0.0
    %430 = vmatprep.subr.mxu0 0.0
    %431 = vmatpush1.msra.mxu0 0.0
    %432 = vmatprep.subr.mxu0 0.0
    %433 = vmatpush1.msra.mxu0 0.0
    %434 = vmatprep.mubr.f32.mxu0 0.0
    %435 = vmatmul.mubr.f32.gmra.mrb[0].mxu0 %v368
    %v436 = vpop.f32.mrb[0].mxu0
    %v437 = vadd.f32 0.0, %v436
    %v438 = vpop.f32.mrb[0].mxu0
    %439 = vdwg.mxu0
    %v441 = vrot.slane %v437, 4
    %v443 = vadd.f32 %v151, %v441
    %v444 = vxor.u32 %v443, 2147483648
    %v445 = vmul.f32 %v444, 1.442695
    %v446 = vpow.pop %v445
    %v447 = vadd.f32 %v446, 1.0
    %v448 = vrcp.pop %v447
    %v449 = vmul.f32 1.0, %v448
    %v450 = vtanh.pop %v443
    %v452 = vrot.slane %v357, 6
    %v454 = vmul.f32 %v449, %v452
    %456 = vrot.lane.b32.xlu0 %v450, 64
    %v457 = vpop.permute.xlu0 %456
    %v459 = vmul.f32 %v449, %v457
    %461 = vrot.lane.b32.xlu0 %v459, 32
    %v462 = vpop.permute.xlu0 %461
    %v464 = vadd.f32 %v454, %v462
    %v465 = vtanh.pop %v464
    %467 = vrot.lane.b32.xlu0 %v465, 64
    %v468 = vpop.permute.xlu0 %467
    %v470 = vmul.f32 %v449, %v468
    %v472 = vrot.slane %v470, 4
    %473 = vrot.lane.b32.xlu0 %v472, 32
    %v474 = vpop.permute.xlu0 %473
    %v475 = vsel %vm159, %v474, 0
    %477 = vmatprep.subr.mxu0 0.0
    %478 = vmatpush1.msra.mxu0 %v62
    %479 = vmatprep.subr.mxu0 0.0
    %480 = vmatpush1.msra.mxu0 %v63
    %481 = vmatprep.subr.mxu0 0.0
    %482 = vmatpush1.msra.mxu0 %v64
    %483 = vmatprep.subr.mxu0 0.0
    %484 = vmatpush1.msra.mxu0 %v65
    %485 = vmatprep.subr.mxu0 0.0
    %486 = vmatpush1.msra.mxu0 0.0
    %487 = vmatprep.subr.mxu0 0.0
    %488 = vmatpush1.msra.mxu0 0.0
    %489 = vmatprep.subr.mxu0 0.0
    %490 = vmatpush1.msra.mxu0 0.0
    %491 = vmatprep.subr.mxu0 0.0
    %492 = vmatpush1.msra.mxu0 0.0
    %493 = vmatprep.subr.mxu0 0.0
    %494 = vmatpush1.msra.mxu0 0.0
    %495 = vmatprep.subr.mxu0 0.0
    %496 = vmatpush1.msra.mxu0 0.0
    %497 = vmatprep.subr.mxu0 0.0
    %498 = vmatpush1.msra.mxu0 0.0
    %499 = vmatprep.subr.mxu0 0.0
    %500 = vmatpush1.msra.mxu0 0.0
    %501 = vmatprep.subr.mxu0 0.0
    %502 = vmatpush1.msra.mxu0 0.0
    %503 = vmatprep.subr.mxu0 0.0
    %504 = vmatpush1.msra.mxu0 0.0
    %505 = vmatprep.subr.mxu0 0.0
    %506 = vmatpush1.msra.mxu0 0.0
    %507 = vmatprep.subr.mxu0 0.0
    %508 = vmatpush1.msra.mxu0 0.0
    %509 = vmatprep.subr.mxu0 0.0
    %510 = vmatpush1.msra.mxu0 0.0
    %511 = vmatprep.subr.mxu0 0.0
    %512 = vmatpush1.msra.mxu0 0.0
    %513 = vmatprep.subr.mxu0 0.0
    %514 = vmatpush1.msra.mxu0 0.0
    %515 = vmatprep.subr.mxu0 0.0
    %516 = vmatpush1.msra.mxu0 0.0
    %517 = vmatprep.subr.mxu0 0.0
    %518 = vmatpush1.msra.mxu0 0.0
    %519 = vmatprep.subr.mxu0 0.0
    %520 = vmatpush1.msra.mxu0 0.0
    %521 = vmatprep.subr.mxu0 0.0
    %522 = vmatpush1.msra.mxu0 0.0
    %523 = vmatprep.subr.mxu0 0.0
    %524 = vmatpush1.msra.mxu0 0.0
    %525 = vmatprep.subr.mxu0 0.0
    %526 = vmatpush1.msra.mxu0 0.0
    %527 = vmatprep.subr.mxu0 0.0
    %528 = vmatpush1.msra.mxu0 0.0
    %529 = vmatprep.subr.mxu0 0.0
    %530 = vmatpush1.msra.mxu0 0.0
    %531 = vmatprep.subr.mxu0 0.0
    %532 = vmatpush1.msra.mxu0 0.0
    %533 = vmatprep.subr.mxu0 0.0
    %534 = vmatpush1.msra.mxu0 0.0
    %535 = vmatprep.subr.mxu0 0.0
    %536 = vmatpush1.msra.mxu0 0.0
    %537 = vmatprep.subr.mxu0 0.0
    %538 = vmatpush1.msra.mxu0 0.0
    %539 = vmatprep.subr.mxu0 0.0
    %540 = vmatpush1.msra.mxu0 0.0
    %541 = vmatprep.mubr.f32.mxu0 0.0
    %542 = vmatmul.mubr.f32.gmra.mrb[0].mxu0 %v475
    %v543 = vpop.f32.mrb[0].mxu0
    %v544 = vadd.f32 0.0, %v543
    %v545 = vpop.f32.mrb[0].mxu0
    %546 = vdwg.mxu0
    %v548 = vrot.slane %v544, 2
    %v550 = vadd.f32 %v151, %v548
    %v551 = vxor.u32 %v550, 2147483648
    %v552 = vmul.f32 %v551, 1.442695
    %v553 = vpow.pop %v552
    %v554 = vadd.f32 %v553, 1.0
    %v555 = vrcp.pop %v554
    %v556 = vmul.f32 1.0, %v555
    %v557 = vtanh.pop %v550
    %v559 = vrot.slane %v464, 6
    %v561 = vmul.f32 %v556, %v559
    %563 = vrot.lane.b32.xlu0 %v557, 64
    %v564 = vpop.permute.xlu0 %563
    %v566 = vmul.f32 %v556, %v564
    %568 = vrot.lane.b32.xlu0 %v566, 32
    %v569 = vpop.permute.xlu0 %568
    %v571 = vadd.f32 %v561, %v569
    %v572 = vtanh.pop %v571
    %574 = vrot.lane.b32.xlu0 %v572, 64
    %v575 = vpop.permute.xlu0 %574
    %v577 = vmul.f32 %v556, %v575
    %v579 = vrot.slane %v577, 6
    %580 = vrot.lane.b32.xlu0 %v579, 32
    %v581 = vpop.permute.xlu0 %580
    %v582 = vsel %vm159, %v581, 0
    %584 = vmatprep.subr.mxu0 0.0
    %585 = vmatpush1.msra.mxu0 %v62
    %586 = vmatprep.subr.mxu0 0.0
    %587 = vmatpush1.msra.mxu0 %v63
    %588 = vmatprep.subr.mxu0 0.0
    %589 = vmatpush1.msra.mxu0 %v64
    %590 = vmatprep.subr.mxu0 0.0
    %591 = vmatpush1.msra.mxu0 %v65
    %592 = vmatprep.subr.mxu0 0.0
    %593 = vmatpush1.msra.mxu0 0.0
    %594 = vmatprep.subr.mxu0 0.0
    %595 = vmatpush1.msra.mxu0 0.0
    %596 = vmatprep.subr.mxu0 0.0
    %597 = vmatpush1.msra.mxu0 0.0
    %598 = vmatprep.subr.mxu0 0.0
    %599 = vmatpush1.msra.mxu0 0.0
    %600 = vmatprep.subr.mxu0 0.0
    %601 = vmatpush1.msra.mxu0 0.0
    %602 = vmatprep.subr.mxu0 0.0
    %603 = vmatpush1.msra.mxu0 0.0
    %604 = vmatprep.subr.mxu0 0.0
    %605 = vmatpush1.msra.mxu0 0.0
    %606 = vmatprep.subr.mxu0 0.0
    %607 = vmatpush1.msra.mxu0 0.0
    %608 = vmatprep.subr.mxu0 0.0
    %609 = vmatpush1.msra.mxu0 0.0
    %610 = vmatprep.subr.mxu0 0.0
    %611 = vmatpush1.msra.mxu0 0.0
    %612 = vmatprep.subr.mxu0 0.0
    %613 = vmatpush1.msra.mxu0 0.0
    %614 = vmatprep.subr.mxu0 0.0
    %615 = vmatpush1.msra.mxu0 0.0
    %616 = vmatprep.subr.mxu0 0.0
    %617 = vmatpush1.msra.mxu0 0.0
    %618 = vmatprep.subr.mxu0 0.0
    %619 = vmatpush1.msra.mxu0 0.0
    %620 = vmatprep.subr.mxu0 0.0
    %621 = vmatpush1.msra.mxu0 0.0
    %622 = vmatprep.subr.mxu0 0.0
    %623 = vmatpush1.msra.mxu0 0.0
    %624 = vmatprep.subr.mxu0 0.0
    %625 = vmatpush1.msra.mxu0 0.0
    %626 = vmatprep.subr.mxu0 0.0
    %627 = vmatpush1.msra.mxu0 0.0
    %628 = vmatprep.subr.mxu0 0.0
    %629 = vmatpush1.msra.mxu0 0.0
    %630 = vmatprep.subr.mxu0 0.0
    %631 = vmatpush1.msra.mxu0 0.0
    %632 = vmatprep.subr.mxu0 0.0
    %633 = vmatpush1.msra.mxu0 0.0
    %634 = vmatprep.subr.mxu0 0.0
    %635 = vmatpush1.msra.mxu0 0.0
    %636 = vmatprep.subr.mxu0 0.0
    %637 = vmatpush1.msra.mxu0 0.0
    %638 = vmatprep.subr.mxu0 0.0
    %639 = vmatpush1.msra.mxu0 0.0
    %640 = vmatprep.subr.mxu0 0.0
    %641 = vmatpush1.msra.mxu0 0.0
    %642 = vmatprep.subr.mxu0 0.0
    %643 = vmatpush1.msra.mxu0 0.0
    %644 = vmatprep.subr.mxu0 0.0
    %645 = vmatpush1.msra.mxu0 0.0
    %646 = vmatprep.subr.mxu0 0.0
    %647 = vmatpush1.msra.mxu0 0.0
    %648 = vmatprep.mubr.f32.mxu0 0.0
    %649 = vmatmul.mubr.f32.gmra.mrb[0].mxu0 %v582
    %v650 = vpop.f32.mrb[0].mxu0
    %v651 = vadd.f32 0.0, %v650
    %v652 = vpop.f32.mrb[0].mxu0
    %653 = vdwg.mxu0
    %v654 = vadd.f32 %v156, %v651
    %v655 = vxor.u32 %v654, 2147483648
    %v656 = vmul.f32 %v655, 1.442695
    %v657 = vpow.pop %v656
    %v658 = vadd.f32 %v657, 1.0
    %v659 = vrcp.pop %v658
    %v660 = vmul.f32 1.0, %v659
    %v661 = vtanh.pop %v654
    %v663 = vrot.slane %v571, 6
    %v665 = vmul.f32 %v660, %v663
    %667 = vrot.lane.b32.xlu0 %v661, 64
    %v668 = vpop.permute.xlu0 %667
    %v670 = vmul.f32 %v660, %v668
    %672 = vrot.lane.b32.xlu0 %v670, 32
    %v673 = vpop.permute.xlu0 %672
    %v675 = vadd.f32 %v665, %v673
    %v676 = vtanh.pop %v675
    %678 = vrot.lane.b32.xlu0 %v676, 64
    %v679 = vpop.permute.xlu0 %678
    %v681 = vmul.f32 %v660, %v679
    %683 = vrot.lane.b32.xlu0 %v681, 32
    %v684 = vpop.permute.xlu0 %683
    %v685 = vsel %vm159, %v684, 0
    %687 = vmatprep.subr.mxu0 0.0
    %688 = vmatpush1.msra.mxu0 %v62
    %689 = vmatprep.subr.mxu0 0.0
    %690 = vmatpush1.msra.mxu0 %v63
    %691 = vmatprep.subr.mxu0 0.0
    %692 = vmatpush1.msra.mxu0 %v64
    %693 = vmatprep.subr.mxu0 0.0
    %694 = vmatpush1.msra.mxu0 %v65
    %695 = vmatprep.subr.mxu0 0.0
    %696 = vmatpush1.msra.mxu0 0.0
    %697 = vmatprep.subr.mxu0 0.0
    %698 = vmatpush1.msra.mxu0 0.0
    %699 = vmatprep.subr.mxu0 0.0
    %700 = vmatpush1.msra.mxu0 0.0
    %701 = vmatprep.subr.mxu0 0.0
    %702 = vmatpush1.msra.mxu0 0.0
    %703 = vmatprep.subr.mxu0 0.0
    %704 = vmatpush1.msra.mxu0 0.0
    %705 = vmatprep.subr.mxu0 0.0
    %706 = vmatpush1.msra.mxu0 0.0
    %707 = vmatprep.subr.mxu0 0.0
    %708 = vmatpush1.msra.mxu0 0.0
    %709 = vmatprep.subr.mxu0 0.0
    %710 = vmatpush1.msra.mxu0 0.0
    %711 = vmatprep.subr.mxu0 0.0
    %712 = vmatpush1.msra.mxu0 0.0
    %713 = vmatprep.subr.mxu0 0.0
    %714 = vmatpush1.msra.mxu0 0.0
    %715 = vmatprep.subr.mxu0 0.0
    %716 = vmatpush1.msra.mxu0 0.0
    %717 = vmatprep.subr.mxu0 0.0
    %718 = vmatpush1.msra.mxu0 0.0
    %719 = vmatprep.subr.mxu0 0.0
    %720 = vmatpush1.msra.mxu0 0.0
    %721 = vmatprep.subr.mxu0 0.0
    %722 = vmatpush1.msra.mxu0 0.0
    %723 = vmatprep.subr.mxu0 0.0
    %724 = vmatpush1.msra.mxu0 0.0
    %725 = vmatprep.subr.mxu0 0.0
    %726 = vmatpush1.msra.mxu0 0.0
    %727 = vmatprep.subr.mxu0 0.0
    %728 = vmatpush1.msra.mxu0 0.0
    %729 = vmatprep.subr.mxu0 0.0
    %730 = vmatpush1.msra.mxu0 0.0
    %731 = vmatprep.subr.mxu0 0.0
    %732 = vmatpush1.msra.mxu0 0.0
    %733 = vmatprep.subr.mxu0 0.0
    %734 = vmatpush1.msra.mxu0 0.0
    %735 = vmatprep.subr.mxu0 0.0
    %736 = vmatpush1.msra.mxu0 0.0
    %737 = vmatprep.subr.mxu0 0.0
    %738 = vmatpush1.msra.mxu0 0.0
    %739 = vmatprep.subr.mxu0 0.0
    %740 = vmatpush1.msra.mxu0 0.0
    %741 = vmatprep.subr.mxu0 0.0
    %742 = vmatpush1.msra.mxu0 0.0
    %743 = vmatprep.subr.mxu0 0.0
    %744 = vmatpush1.msra.mxu0 0.0
    %745 = vmatprep.subr.mxu0 0.0
    %746 = vmatpush1.msra.mxu0 0.0
    %747 = vmatprep.subr.mxu0 0.0
    %748 = vmatpush1.msra.mxu0 0.0
    %749 = vmatprep.subr.mxu0 0.0
    %750 = vmatpush1.msra.mxu0 0.0
    %751 = vmatprep.mubr.f32.mxu0 0.0
    %752 = vmatmul.mubr.f32.gmra.mrb[0].mxu0 %v685
    %v753 = vpop.f32.mrb[0].mxu0
    %v754 = vadd.f32 0.0, %v753
    %v755 = vpop.f32.mrb[0].mxu0
    %756 = vdwg.mxu0
    %v758 = vrot.slane %v754, 6
    %v760 = vadd.f32 %v156, %v758
    %v761 = vxor.u32 %v760, 2147483648
    %v762 = vmul.f32 %v761, 1.442695
    %v763 = vpow.pop %v762
    %v764 = vadd.f32 %v763, 1.0
    %v765 = vrcp.pop %v764
    %v766 = vmul.f32 1.0, %v765
    %v767 = vtanh.pop %v760
    %v769 = vrot.slane %v675, 6
    %v771 = vmul.f32 %v766, %v769
    %773 = vrot.lane.b32.xlu0 %v767, 64
    %v774 = vpop.permute.xlu0 %773
    %v776 = vmul.f32 %v766, %v774
    %778 = vrot.lane.b32.xlu0 %v776, 32
    %v779 = vpop.permute.xlu0 %778
    %v781 = vadd.f32 %v771, %v779
    %v782 = vtanh.pop %v781
    %784 = vrot.lane.b32.xlu0 %v782, 64
    %v785 = vpop.permute.xlu0 %784
    %v787 = vmul.f32 %v766, %v785
    %v789 = vrot.slane %v787, 2
    %790 = vrot.lane.b32.xlu0 %v789, 32
    %v791 = vpop.permute.xlu0 %790
    %v792 = vsel %vm159, %v791, 0
    %794 = vmatprep.subr.mxu0 0.0
    %795 = vmatpush1.msra.mxu0 %v62
    %796 = vmatprep.subr.mxu0 0.0
    %797 = vmatpush1.msra.mxu0 %v63
    %798 = vmatprep.subr.mxu0 0.0
    %799 = vmatpush1.msra.mxu0 %v64
    %800 = vmatprep.subr.mxu0 0.0
    %801 = vmatpush1.msra.mxu0 %v65
    %802 = vmatprep.subr.mxu0 0.0
    %803 = vmatpush1.msra.mxu0 0.0
    %804 = vmatprep.subr.mxu0 0.0
    %805 = vmatpush1.msra.mxu0 0.0
    %806 = vmatprep.subr.mxu0 0.0
    %807 = vmatpush1.msra.mxu0 0.0
    %808 = vmatprep.subr.mxu0 0.0
    %809 = vmatpush1.msra.mxu0 0.0
    %810 = vmatprep.subr.mxu0 0.0
    %811 = vmatpush1.msra.mxu0 0.0
    %812 = vmatprep.subr.mxu0 0.0
    %813 = vmatpush1.msra.mxu0 0.0
    %814 = vmatprep.subr.mxu0 0.0
    %815 = vmatpush1.msra.mxu0 0.0
    %816 = vmatprep.subr.mxu0 0.0
    %817 = vmatpush1.msra.mxu0 0.0
    %818 = vmatprep.subr.mxu0 0.0
    %819 = vmatpush1.msra.mxu0 0.0
    %820 = vmatprep.subr.mxu0 0.0
    %821 = vmatpush1.msra.mxu0 0.0
    %822 = vmatprep.subr.mxu0 0.0
    %823 = vmatpush1.msra.mxu0 0.0
    %824 = vmatprep.subr.mxu0 0.0
    %825 = vmatpush1.msra.mxu0 0.0
    %826 = vmatprep.subr.mxu0 0.0
    %827 = vmatpush1.msra.mxu0 0.0
    %828 = vmatprep.subr.mxu0 0.0
    %829 = vmatpush1.msra.mxu0 0.0
    %830 = vmatprep.subr.mxu0 0.0
    %831 = vmatpush1.msra.mxu0 0.0
    %832 = vmatprep.subr.mxu0 0.0
    %833 = vmatpush1.msra.mxu0 0.0
    %834 = vmatprep.subr.mxu0 0.0
    %835 = vmatpush1.msra.mxu0 0.0
    %836 = vmatprep.subr.mxu0 0.0
    %837 = vmatpush1.msra.mxu0 0.0
    %838 = vmatprep.subr.mxu0 0.0
    %839 = vmatpush1.msra.mxu0 0.0
    %840 = vmatprep.subr.mxu0 0.0
    %841 = vmatpush1.msra.mxu0 0.0
    %842 = vmatprep.subr.mxu0 0.0
    %843 = vmatpush1.msra.mxu0 0.0
    %844 = vmatprep.subr.mxu0 0.0
    %845 = vmatpush1.msra.mxu0 0.0
    %846 = vmatprep.subr.mxu0 0.0
    %847 = vmatpush1.msra.mxu0 0.0
    %848 = vmatprep.subr.mxu0 0.0
    %849 = vmatpush1.msra.mxu0 0.0
    %850 = vmatprep.subr.mxu0 0.0
    %851 = vmatpush1.msra.mxu0 0.0
    %852 = vmatprep.subr.mxu0 0.0
    %853 = vmatpush1.msra.mxu0 0.0
    %854 = vmatprep.subr.mxu0 0.0
    %855 = vmatpush1.msra.mxu0 0.0
    %856 = vmatprep.subr.mxu0 0.0
    %857 = vmatpush1.msra.mxu0 0.0
    %858 = vmatprep.mubr.f32.mxu0 0.0
    %859 = vmatmul.mubr.f32.gmra.mrb[0].mxu0 %v792
    %v860 = vpop.f32.mrb[0].mxu0
    %v861 = vadd.f32 0.0, %v860
    %v862 = vpop.f32.mrb[0].mxu0
    %863 = vdwg.mxu0
    %v865 = vrot.slane %v861, 4
    %v867 = vadd.f32 %v156, %v865
    %v868 = vxor.u32 %v867, 2147483648
    %v869 = vmul.f32 %v868, 1.442695
    %v870 = vpow.pop %v869
    %v871 = vadd.f32 %v870, 1.0
    %v872 = vrcp.pop %v871
    %v873 = vmul.f32 1.0, %v872
    %v874 = vtanh.pop %v867
    %v876 = vrot.slane %v781, 6
    %v878 = vmul.f32 %v873, %v876
    %880 = vrot.lane.b32.xlu0 %v874, 64
    %v881 = vpop.permute.xlu0 %880
    %v883 = vmul.f32 %v873, %v881
    %885 = vrot.lane.b32.xlu0 %v883, 32
    %v886 = vpop.permute.xlu0 %885
    %v888 = vadd.f32 %v878, %v886
    %v889 = vtanh.pop %v888
    %891 = vrot.lane.b32.xlu0 %v889, 64
    %v892 = vpop.permute.xlu0 %891
    %v894 = vmul.f32 %v873, %v892
    %v896 = vrot.slane %v894, 4
    %897 = vrot.lane.b32.xlu0 %v896, 32
    %v898 = vpop.permute.xlu0 %897
    %v899 = vsel %vm159, %v898, 0
    %901 = vmatprep.subr.mxu0 0.0
    %902 = vmatpush1.msra.mxu0 %v62
    %903 = vmatprep.subr.mxu0 0.0
    %904 = vmatpush1.msra.mxu0 %v63
    %905 = vmatprep.subr.mxu0 0.0
    %906 = vmatpush1.msra.mxu0 %v64
    %907 = vmatprep.subr.mxu0 0.0
    %908 = vmatpush1.msra.mxu0 %v65
    %909 = vmatprep.subr.mxu0 0.0
    %910 = vmatpush1.msra.mxu0 0.0
    %911 = vmatprep.subr.mxu0 0.0
    %912 = vmatpush1.msra.mxu0 0.0
    %913 = vmatprep.subr.mxu0 0.0
    %914 = vmatpush1.msra.mxu0 0.0
    %915 = vmatprep.subr.mxu0 0.0
    %916 = vmatpush1.msra.mxu0 0.0
    %917 = vmatprep.subr.mxu0 0.0
    %918 = vmatpush1.msra.mxu0 0.0
    %919 = vmatprep.subr.mxu0 0.0
    %920 = vmatpush1.msra.mxu0 0.0
    %921 = vmatprep.subr.mxu0 0.0
    %922 = vmatpush1.msra.mxu0 0.0
    %923 = vmatprep.subr.mxu0 0.0
    %924 = vmatpush1.msra.mxu0 0.0
    %925 = vmatprep.subr.mxu0 0.0
    %926 = vmatpush1.msra.mxu0 0.0
    %927 = vmatprep.subr.mxu0 0.0
    %928 = vmatpush1.msra.mxu0 0.0
    %929 = vmatprep.subr.mxu0 0.0
    %930 = vmatpush1.msra.mxu0 0.0
    %931 = vmatprep.subr.mxu0 0.0
    %932 = vmatpush1.msra.mxu0 0.0
    %933 = vmatprep.subr.mxu0 0.0
    %934 = vmatpush1.msra.mxu0 0.0
    %935 = vmatprep.subr.mxu0 0.0
    %936 = vmatpush1.msra.mxu0 0.0
    %937 = vmatprep.subr.mxu0 0.0
    %938 = vmatpush1.msra.mxu0 0.0
    %939 = vmatprep.subr.mxu0 0.0
    %940 = vmatpush1.msra.mxu0 0.0
    %941 = vmatprep.subr.mxu0 0.0
    %942 = vmatpush1.msra.mxu0 0.0
    %943 = vmatprep.subr.mxu0 0.0
    %944 = vmatpush1.msra.mxu0 0.0
    %945 = vmatprep.subr.mxu0 0.0
    %946 = vmatpush1.msra.mxu0 0.0
    %947 = vmatprep.subr.mxu0 0.0
    %948 = vmatpush1.msra.mxu0 0.0
    %949 = vmatprep.subr.mxu0 0.0
    %950 = vmatpush1.msra.mxu0 0.0
    %951 = vmatprep.subr.mxu0 0.0
    %952 = vmatpush1.msra.mxu0 0.0
    %953 = vmatprep.subr.mxu0 0.0
    %954 = vmatpush1.msra.mxu0 0.0
    %955 = vmatprep.subr.mxu0 0.0
    %956 = vmatpush1.msra.mxu0 0.0
    %957 = vmatprep.subr.mxu0 0.0
    %958 = vmatpush1.msra.mxu0 0.0
    %959 = vmatprep.subr.mxu0 0.0
    %960 = vmatpush1.msra.mxu0 0.0
    %961 = vmatprep.subr.mxu0 0.0
    %962 = vmatpush1.msra.mxu0 0.0
    %963 = vmatprep.subr.mxu0 0.0
    %964 = vmatpush1.msra.mxu0 0.0
    %965 = vmatprep.mubr.f32.mxu0 0.0
    %966 = vmatmul.mubr.f32.gmra.mrb[0].mxu0 %v899
    %v967 = vpop.f32.mrb[0].mxu0
    %v968 = vadd.f32 0.0, %v967
    %v969 = vpop.f32.mrb[0].mxu0
    %970 = vdwg.mxu0
    %v972 = vrot.slane %v968, 2
    %v974 = vadd.f32 %v156, %v972
    %v975 = vxor.u32 %v974, 2147483648
    %v976 = vmul.f32 %v975, 1.442695
    %v977 = vpow.pop %v976
    %v978 = vadd.f32 %v977, 1.0
    %v979 = vrcp.pop %v978
    %v980 = vmul.f32 1.0, %v979
    %v981 = vtanh.pop %v974
    %v983 = vrot.slane %v888, 6
    %v985 = vmul.f32 %v980, %v983
    %987 = vrot.lane.b32.xlu0 %v981, 64
    %v988 = vpop.permute.xlu0 %987
    %v990 = vmul.f32 %v980, %v988
    %992 = vrot.lane.b32.xlu0 %v990, 32
    %v993 = vpop.permute.xlu0 %992
    %v995 = vadd.f32 %v985, %v993
    %v996 = vtanh.pop %v995
    %998 = vrot.lane.b32.xlu0 %v996, 64
    %v999 = vpop.permute.xlu0 %998
    %v1001 = vmul.f32 %v980, %v999
    %vm1002 = vcmask 1041408
    %v1003 = vsel %vm1002, %v257, %v363
    %vm1004 = vcmask 1043456
    %v1005 = vsel %vm1004, %v1003, %v470
    %vm1006 = vcmask 1045504
    %v1007 = vsel %vm1006, %v1005, %v577
    %v1008 = vsel %vm1002, %v681, %v787
    %v1009 = vsel %vm1004, %v1008, %v894
    %v1010 = vsel %vm1006, %v1009, %v1001
    %v1011 = vld [vmem:[%s4] sm:$0xff]
    %v1012 = vld [vmem:[%s4 + $0x8] sm:$0xff]
    %v1013 = vld [vmem:[%s4 + $0x10] sm:$0xff]
    %v1014 = vld [vmem:[%s4 + $0x18] sm:$0xff]
    %v1015 = vld [vmem:[#allocation5] sm:$0xff]
    %v1016 = vld [vmem:[#allocation5 + $0x8] sm:$0xff]
    %v1017 = vld [vmem:[#allocation5 + $0x10] sm:$0xff]
    %v1018 = vld [vmem:[#allocation5 + $0x18] sm:$0xff]
    %v1019 = vld [vmem:[%s6] sm:$0x1]
    %v1021 = vlaneseq
    %v1022 = vshrl.u32 %v1021, 7
    %v1023 = vsub.s32 0, %v1022
    %v1024 = vrot.slane %v1019, %v1023
    %1028 = vrot.lane.b32.xlu0 %v1007, 32
    %v1029 = vpop.permute.xlu0 %1028
    %1030 = vrot.lane.b32.xlu0 %v1010, 32
    %v1031 = vpop.permute.xlu0 %1030
    %v1032 = vsel %vm159, %v1029, 0
    %v1034 = vsel %vm159, %v1031, 0
    %1036 = vmatprep.subr.mxu0 0.0
    %1037 = vmatpush1.msra.mxu0 %v1011
    %1038 = vmatprep.subr.mxu0 0.0
    %1039 = vmatpush1.msra.mxu0 %v1012
    %1040 = vmatprep.subr.mxu0 0.0
    %1041 = vmatpush1.msra.mxu0 %v1013
    %1042 = vmatprep.subr.mxu0 0.0
    %1043 = vmatpush1.msra.mxu0 %v1014
    %1044 = vmatprep.subr.mxu0 0.0
    %1045 = vmatpush1.msra.mxu0 0.0
    %1046 = vmatprep.subr.mxu0 0.0
    %1047 = vmatpush1.msra.mxu0 0.0
    %1048 = vmatprep.subr.mxu0 0.0
    %1049 = vmatpush1.msra.mxu0 0.0
    %1050 = vmatprep.subr.mxu0 0.0
    %1051 = vmatpush1.msra.mxu0 0.0
    %1052 = vmatprep.subr.mxu0 0.0
    %1053 = vmatpush1.msra.mxu0 0.0
    %1054 = vmatprep.subr.mxu0 0.0
    %1055 = vmatpush1.msra.mxu0 0.0
    %1056 = vmatprep.subr.mxu0 0.0
    %1057 = vmatpush1.msra.mxu0 0.0
    %1058 = vmatprep.subr.mxu0 0.0
    %1059 = vmatpush1.msra.mxu0 0.0
    %1060 = vmatprep.subr.mxu0 0.0
    %1061 = vmatpush1.msra.mxu0 0.0
    %1062 = vmatprep.subr.mxu0 0.0
    %1063 = vmatpush1.msra.mxu0 0.0
    %1064 = vmatprep.subr.mxu0 0.0
    %1065 = vmatpush1.msra.mxu0 0.0
    %1066 = vmatprep.subr.mxu0 0.0
    %1067 = vmatpush1.msra.mxu0 0.0
    %1068 = vmatprep.subr.mxu0 0.0
    %1069 = vmatpush1.msra.mxu0 0.0
    %1070 = vmatprep.subr.mxu0 0.0
    %1071 = vmatpush1.msra.mxu0 0.0
    %1072 = vmatprep.subr.mxu0 0.0
    %1073 = vmatpush1.msra.mxu0 0.0
    %1074 = vmatprep.subr.mxu0 0.0
    %1075 = vmatpush1.msra.mxu0 0.0
    %1076 = vmatprep.subr.mxu0 0.0
    %1077 = vmatpush1.msra.mxu0 0.0
    %1078 = vmatprep.subr.mxu0 0.0
    %1079 = vmatpush1.msra.mxu0 0.0
    %1080 = vmatprep.subr.mxu0 0.0
    %1081 = vmatpush1.msra.mxu0 0.0
    %1082 = vmatprep.subr.mxu0 0.0
    %1083 = vmatpush1.msra.mxu0 0.0
    %1084 = vmatprep.subr.mxu0 0.0
    %1085 = vmatpush1.msra.mxu0 0.0
    %1086 = vmatprep.subr.mxu0 0.0
    %1087 = vmatpush1.msra.mxu0 0.0
    %1088 = vmatprep.subr.mxu0 0.0
    %1089 = vmatpush1.msra.mxu0 0.0
    %1090 = vmatprep.subr.mxu0 0.0
    %1091 = vmatpush1.msra.mxu0 0.0
    %1092 = vmatprep.subr.mxu0 0.0
    %1093 = vmatpush1.msra.mxu0 0.0
    %1094 = vmatprep.subr.mxu0 0.0
    %1095 = vmatpush1.msra.mxu0 0.0
    %1096 = vmatprep.subr.mxu0 0.0
    %1097 = vmatpush1.msra.mxu0 0.0
    %1098 = vmatprep.subr.mxu0 0.0
    %1099 = vmatpush1.msra.mxu0 0.0
    %1100 = vmatprep.mubr.f32.mxu0 0.0
    %1101 = vmatmul.mubr.f32.gmra.mrb[0].mxu0 %v1032
    %v1102 = vpop.f32.mrb[0].mxu0
    %v1103 = vadd.f32 %v1024, %v1102
    %v1104 = vpop.f32.mrb[0].mxu0
    %1105 = vmatprep.mubr.f32.mxu0 0.0
    %1106 = vmatmul.mubr.f32.gmra.mrb[0].mxu0 %v1034
    %v1107 = vpop.f32.mrb[0].mxu0
    %v1108 = vadd.f32 %v1024, %v1107
    %v1109 = vpop.f32.mrb[0].mxu0
    %1110 = vdwg.mxu0
    %1111 = vmatprep.subr.mxu0 0.0
    %1112 = vmatpush1.msra.mxu0 %v1015
    %1113 = vmatprep.subr.mxu0 0.0
    %1114 = vmatpush1.msra.mxu0 %v1016
    %1115 = vmatprep.subr.mxu0 0.0
    %1116 = vmatpush1.msra.mxu0 %v1017
    %1117 = vmatprep.subr.mxu0 0.0
    %1118 = vmatpush1.msra.mxu0 %v1018
    %1119 = vmatprep.subr.mxu0 0.0
    %1120 = vmatpush1.msra.mxu0 0.0
    %1121 = vmatprep.subr.mxu0 0.0
    %1122 = vmatpush1.msra.mxu0 0.0
    %1123 = vmatprep.subr.mxu0 0.0
    %1124 = vmatpush1.msra.mxu0 0.0
    %1125 = vmatprep.subr.mxu0 0.0
    %1126 = vmatpush1.msra.mxu0 0.0
    %1127 = vmatprep.subr.mxu0 0.0
    %1128 = vmatpush1.msra.mxu0 0.0
    %1129 = vmatprep.subr.mxu0 0.0
    %1130 = vmatpush1.msra.mxu0 0.0
    %1131 = vmatprep.subr.mxu0 0.0
    %1132 = vmatpush1.msra.mxu0 0.0
    %1133 = vmatprep.subr.mxu0 0.0
    %1134 = vmatpush1.msra.mxu0 0.0
    %1135 = vmatprep.subr.mxu0 0.0
    %1136 = vmatpush1.msra.mxu0 0.0
    %1137 = vmatprep.subr.mxu0 0.0
    %1138 = vmatpush1.msra.mxu0 0.0
    %1139 = vmatprep.subr.mxu0 0.0
    %1140 = vmatpush1.msra.mxu0 0.0
    %1141 = vmatprep.subr.mxu0 0.0
    %1142 = vmatpush1.msra.mxu0 0.0
    %1143 = vmatprep.subr.mxu0 0.0
    %1144 = vmatpush1.msra.mxu0 0.0
    %1145 = vmatprep.subr.mxu0 0.0
    %1146 = vmatpush1.msra.mxu0 0.0
    %1147 = vmatprep.subr.mxu0 0.0
    %1148 = vmatpush1.msra.mxu0 0.0
    %1149 = vmatprep.subr.mxu0 0.0
    %1150 = vmatpush1.msra.mxu0 0.0
    %1151 = vmatprep.subr.mxu0 0.0
    %1152 = vmatpush1.msra.mxu0 0.0
    %1153 = vmatprep.subr.mxu0 0.0
    %1154 = vmatpush1.msra.mxu0 0.0
    %1155 = vmatprep.subr.mxu0 0.0
    %1156 = vmatpush1.msra.mxu0 0.0
    %1157 = vmatprep.subr.mxu0 0.0
    %1158 = vmatpush1.msra.mxu0 0.0
    %1159 = vmatprep.subr.mxu0 0.0
    %1160 = vmatpush1.msra.mxu0 0.0
    %1161 = vmatprep.subr.mxu0 0.0
    %1162 = vmatpush1.msra.mxu0 0.0
    %1163 = vmatprep.subr.mxu0 0.0
    %1164 = vmatpush1.msra.mxu0 0.0
    %1165 = vmatprep.subr.mxu0 0.0
    %1166 = vmatpush1.msra.mxu0 0.0
    %1167 = vmatprep.subr.mxu0 0.0
    %1168 = vmatpush1.msra.mxu0 0.0
    %1169 = vmatprep.subr.mxu0 0.0
    %1170 = vmatpush1.msra.mxu0 0.0
    %1171 = vmatprep.subr.mxu0 0.0
    %1172 = vmatpush1.msra.mxu0 0.0
    %1173 = vmatprep.subr.mxu0 0.0
    %1174 = vmatpush1.msra.mxu0 0.0
    %1175 = vmatprep.mubr.f32.mxu0 0.0
    %1176 = vmatmul.mubr.f32.gmra.mrb[0].mxu0 %v161
    %v1177 = vpop.f32.mrb[0].mxu0
    %v1178 = vadd.f32 0.0, %v1177
    %v1179 = vpop.f32.mrb[0].mxu0
    %1180 = vdwg.mxu0
    %v1181 = vadd.f32 %v1103, %v1178
    %v1182 = vxor.u32 %v1181, 2147483648
    %v1183 = vmul.f32 %v1182, 1.442695
    %v1184 = vpow.pop %v1183
    %v1185 = vadd.f32 %v1184, 1.0
    %v1186 = vrcp.pop %v1185
    %v1187 = vmul.f32 1.0, %v1186
    %v1188 = vtanh.pop %v1181
    %v1189 = vmul.f32 %v1187, 0.0
    %1191 = vrot.lane.b32.xlu0 %v1188, 64
    %v1192 = vpop.permute.xlu0 %1191
    %v1194 = vmul.f32 %v1187, %v1192
    %1196 = vrot.lane.b32.xlu0 %v1194, 32
    %v1197 = vpop.permute.xlu0 %1196
    %v1199 = vadd.f32 %v1189, %v1197
    %v1200 = vtanh.pop %v1199
    %1202 = vrot.lane.b32.xlu0 %v1200, 64
    %v1203 = vpop.permute.xlu0 %1202
    %v1205 = vmul.f32 %v1187, %v1203
    %1207 = vrot.lane.b32.xlu0 %v1205, 32
    %v1208 = vpop.permute.xlu0 %1207
    %v1209 = vsel %vm159, %v1208, 0
    %1211 = vmatprep.subr.mxu0 0.0
    %1212 = vmatpush1.msra.mxu0 %v1015
    %1213 = vmatprep.subr.mxu0 0.0
    %1214 = vmatpush1.msra.mxu0 %v1016
    %1215 = vmatprep.subr.mxu0 0.0
    %1216 = vmatpush1.msra.mxu0 %v1017
    %1217 = vmatprep.subr.mxu0 0.0
    %1218 = vmatpush1.msra.mxu0 %v1018
    %1219 = vmatprep.subr.mxu0 0.0
    %1220 = vmatpush1.msra.mxu0 0.0
    %1221 = vmatprep.subr.mxu0 0.0
    %1222 = vmatpush1.msra.mxu0 0.0
    %1223 = vmatprep.subr.mxu0 0.0
    %1224 = vmatpush1.msra.mxu0 0.0
    %1225 = vmatprep.subr.mxu0 0.0
    %1226 = vmatpush1.msra.mxu0 0.0
    %1227 = vmatprep.subr.mxu0 0.0
    %1228 = vmatpush1.msra.mxu0 0.0
    %1229 = vmatprep.subr.mxu0 0.0
    %1230 = vmatpush1.msra.mxu0 0.0
    %1231 = vmatprep.subr.mxu0 0.0
    %1232 = vmatpush1.msra.mxu0 0.0
    %1233 = vmatprep.subr.mxu0 0.0
    %1234 = vmatpush1.msra.mxu0 0.0
    %1235 = vmatprep.subr.mxu0 0.0
    %1236 = vmatpush1.msra.mxu0 0.0
    %1237 = vmatprep.subr.mxu0 0.0
    %1238 = vmatpush1.msra.mxu0 0.0
    %1239 = vmatprep.subr.mxu0 0.0
    %1240 = vmatpush1.msra.mxu0 0.0
    %1241 = vmatprep.subr.mxu0 0.0
    %1242 = vmatpush1.msra.mxu0 0.0
    %1243 = vmatprep.subr.mxu0 0.0
    %1244 = vmatpush1.msra.mxu0 0.0
    %1245 = vmatprep.subr.mxu0 0.0
    %1246 = vmatpush1.msra.mxu0 0.0
    %1247 = vmatprep.subr.mxu0 0.0
    %1248 = vmatpush1.msra.mxu0 0.0
    %1249 = vmatprep.subr.mxu0 0.0
    %1250 = vmatpush1.msra.mxu0 0.0
    %1251 = vmatprep.subr.mxu0 0.0
    %1252 = vmatpush1.msra.mxu0 0.0
    %1253 = vmatprep.subr.mxu0 0.0
    %1254 = vmatpush1.msra.mxu0 0.0
    %1255 = vmatprep.subr.mxu0 0.0
    %1256 = vmatpush1.msra.mxu0 0.0
    %1257 = vmatprep.subr.mxu0 0.0
    %1258 = vmatpush1.msra.mxu0 0.0
    %1259 = vmatprep.subr.mxu0 0.0
    %1260 = vmatpush1.msra.mxu0 0.0
    %1261 = vmatprep.subr.mxu0 0.0
    %1262 = vmatpush1.msra.mxu0 0.0
    %1263 = vmatprep.subr.mxu0 0.0
    %1264 = vmatpush1.msra.mxu0 0.0
    %1265 = vmatprep.subr.mxu0 0.0
    %1266 = vmatpush1.msra.mxu0 0.0
    %1267 = vmatprep.subr.mxu0 0.0
    %1268 = vmatpush1.msra.mxu0 0.0
    %1269 = vmatprep.subr.mxu0 0.0
    %1270 = vmatpush1.msra.mxu0 0.0
    %1271 = vmatprep.subr.mxu0 0.0
    %1272 = vmatpush1.msra.mxu0 0.0
    %1273 = vmatprep.subr.mxu0 0.0
    %1274 = vmatpush1.msra.mxu0 0.0
    %1275 = vmatprep.mubr.f32.mxu0 0.0
    %1276 = vmatmul.mubr.f32.gmra.mrb[0].mxu0 %v1209
    %v1277 = vpop.f32.mrb[0].mxu0
    %v1278 = vadd.f32 0.0, %v1277
    %v1279 = vpop.f32.mrb[0].mxu0
    %1280 = vdwg.mxu0
    %v1282 = vrot.slane %v1278, 6
    %v1284 = vadd.f32 %v1103, %v1282
    %v1285 = vxor.u32 %v1284, 2147483648
    %v1286 = vmul.f32 %v1285, 1.442695
    %v1287 = vpow.pop %v1286
    %v1288 = vadd.f32 %v1287, 1.0
    %v1289 = vrcp.pop %v1288
    %v1290 = vmul.f32 1.0, %v1289
    %v1291 = vtanh.pop %v1284
    %v1293 = vrot.slane %v1199, 6
    %v1295 = vmul.f32 %v1290, %v1293
    %1297 = vrot.lane.b32.xlu0 %v1291, 64
    %v1298 = vpop.permute.xlu0 %1297
    %v1300 = vmul.f32 %v1290, %v1298
    %1302 = vrot.lane.b32.xlu0 %v1300, 32
    %v1303 = vpop.permute.xlu0 %1302
    %v1305 = vadd.f32 %v1295, %v1303
    %v1306 = vtanh.pop %v1305
    %1308 = vrot.lane.b32.xlu0 %v1306, 64
    %v1309 = vpop.permute.xlu0 %1308
    %v1311 = vmul.f32 %v1290, %v1309
    %v1313 = vrot.slane %v1311, 2
    %1314 = vrot.lane.b32.xlu0 %v1313, 32
    %v1315 = vpop.permute.xlu0 %1314
    %v1316 = vsel %vm159, %v1315, 0
    %1318 = vmatprep.subr.mxu0 0.0
    %1319 = vmatpush1.msra.mxu0 %v1015
    %1320 = vmatprep.subr.mxu0 0.0
    %1321 = vmatpush1.msra.mxu0 %v1016
    %1322 = vmatprep.subr.mxu0 0.0
    %1323 = vmatpush1.msra.mxu0 %v1017
    %1324 = vmatprep.subr.mxu0 0.0
    %1325 = vmatpush1.msra.mxu0 %v1018
    %1326 = vmatprep.subr.mxu0 0.0
    %1327 = vmatpush1.msra.mxu0 0.0
    %1328 = vmatprep.subr.mxu0 0.0
    %1329 = vmatpush1.msra.mxu0 0.0
    %1330 = vmatprep.subr.mxu0 0.0
    %1331 = vmatpush1.msra.mxu0 0.0
    %1332 = vmatprep.subr.mxu0 0.0
    %1333 = vmatpush1.msra.mxu0 0.0
    %1334 = vmatprep.subr.mxu0 0.0
    %1335 = vmatpush1.msra.mxu0 0.0
    %1336 = vmatprep.subr.mxu0 0.0
    %1337 = vmatpush1.msra.mxu0 0.0
    %1338 = vmatprep.subr.mxu0 0.0
    %1339 = vmatpush1.msra.mxu0 0.0
    %1340 = vmatprep.subr.mxu0 0.0
    %1341 = vmatpush1.msra.mxu0 0.0
    %1342 = vmatprep.subr.mxu0 0.0
    %1343 = vmatpush1.msra.mxu0 0.0
    %1344 = vmatprep.subr.mxu0 0.0
    %1345 = vmatpush1.msra.mxu0 0.0
    %1346 = vmatprep.subr.mxu0 0.0
    %1347 = vmatpush1.msra.mxu0 0.0
    %1348 = vmatprep.subr.mxu0 0.0
    %1349 = vmatpush1.msra.mxu0 0.0
    %1350 = vmatprep.subr.mxu0 0.0
    %1351 = vmatpush1.msra.mxu0 0.0
    %1352 = vmatprep.subr.mxu0 0.0
    %1353 = vmatpush1.msra.mxu0 0.0
    %1354 = vmatprep.subr.mxu0 0.0
    %1355 = vmatpush1.msra.mxu0 0.0
    %1356 = vmatprep.subr.mxu0 0.0
    %1357 = vmatpush1.msra.mxu0 0.0
    %1358 = vmatprep.subr.mxu0 0.0
    %1359 = vmatpush1.msra.mxu0 0.0
    %1360 = vmatprep.subr.mxu0 0.0
    %1361 = vmatpush1.msra.mxu0 0.0
    %1362 = vmatprep.subr.mxu0 0.0
    %1363 = vmatpush1.msra.mxu0 0.0
    %1364 = vmatprep.subr.mxu0 0.0
    %1365 = vmatpush1.msra.mxu0 0.0
    %1366 = vmatprep.subr.mxu0 0.0
    %1367 = vmatpush1.msra.mxu0 0.0
    %1368 = vmatprep.subr.mxu0 0.0
    %1369 = vmatpush1.msra.mxu0 0.0
    %1370 = vmatprep.subr.mxu0 0.0
    %1371 = vmatpush1.msra.mxu0 0.0
    %1372 = vmatprep.subr.mxu0 0.0
    %1373 = vmatpush1.msra.mxu0 0.0
    %1374 = vmatprep.subr.mxu0 0.0
    %1375 = vmatpush1.msra.mxu0 0.0
    %1376 = vmatprep.subr.mxu0 0.0
    %1377 = vmatpush1.msra.mxu0 0.0
    %1378 = vmatprep.subr.mxu0 0.0
    %1379 = vmatpush1.msra.mxu0 0.0
    %1380 = vmatprep.subr.mxu0 0.0
    %1381 = vmatpush1.msra.mxu0 0.0
    %1382 = vmatprep.mubr.f32.mxu0 0.0
    %1383 = vmatmul.mubr.f32.gmra.mrb[0].mxu0 %v1316
    %v1384 = vpop.f32.mrb[0].mxu0
    %v1385 = vadd.f32 0.0, %v1384
    %v1386 = vpop.f32.mrb[0].mxu0
    %1387 = vdwg.mxu0
    %v1389 = vrot.slane %v1385, 4
    %v1391 = vadd.f32 %v1103, %v1389
    %v1392 = vxor.u32 %v1391, 2147483648
    %v1393 = vmul.f32 %v1392, 1.442695
    %v1394 = vpow.pop %v1393
    %v1395 = vadd.f32 %v1394, 1.0
    %v1396 = vrcp.pop %v1395
    %v1397 = vmul.f32 1.0, %v1396
    %v1398 = vtanh.pop %v1391
    %v1400 = vrot.slane %v1305, 6
    %v1402 = vmul.f32 %v1397, %v1400
    %1404 = vrot.lane.b32.xlu0 %v1398, 64
    %v1405 = vpop.permute.xlu0 %1404
    %v1407 = vmul.f32 %v1397, %v1405
    %1409 = vrot.lane.b32.xlu0 %v1407, 32
    %v1410 = vpop.permute.xlu0 %1409
    %v1412 = vadd.f32 %v1402, %v1410
    %v1413 = vtanh.pop %v1412
    %1415 = vrot.lane.b32.xlu0 %v1413, 64
    %v1416 = vpop.permute.xlu0 %1415
    %v1418 = vmul.f32 %v1397, %v1416
    %v1420 = vrot.slane %v1418, 4
    %1421 = vrot.lane.b32.xlu0 %v1420, 32
    %v1422 = vpop.permute.xlu0 %1421
    %v1423 = vsel %vm159, %v1422, 0
    %1425 = vmatprep.subr.mxu0 0.0
    %1426 = vmatpush1.msra.mxu0 %v1015
    %1427 = vmatprep.subr.mxu0 0.0
    %1428 = vmatpush1.msra.mxu0 %v1016
    %1429 = vmatprep.subr.mxu0 0.0
    %1430 = vmatpush1.msra.mxu0 %v1017
    %1431 = vmatprep.subr.mxu0 0.0
    %1432 = vmatpush1.msra.mxu0 %v1018
    %1433 = vmatprep.subr.mxu0 0.0
    %1434 = vmatpush1.msra.mxu0 0.0
    %1435 = vmatprep.subr.mxu0 0.0
    %1436 = vmatpush1.msra.mxu0 0.0
    %1437 = vmatprep.subr.mxu0 0.0
    %1438 = vmatpush1.msra.mxu0 0.0
    %1439 = vmatprep.subr.mxu0 0.0
    %1440 = vmatpush1.msra.mxu0 0.0
    %1441 = vmatprep.subr.mxu0 0.0
    %1442 = vmatpush1.msra.mxu0 0.0
    %1443 = vmatprep.subr.mxu0 0.0
    %1444 = vmatpush1.msra.mxu0 0.0
    %1445 = vmatprep.subr.mxu0 0.0
    %1446 = vmatpush1.msra.mxu0 0.0
    %1447 = vmatprep.subr.mxu0 0.0
    %1448 = vmatpush1.msra.mxu0 0.0
    %1449 = vmatprep.subr.mxu0 0.0
    %1450 = vmatpush1.msra.mxu0 0.0
    %1451 = vmatprep.subr.mxu0 0.0
    %1452 = vmatpush1.msra.mxu0 0.0
    %1453 = vmatprep.subr.mxu0 0.0
    %1454 = vmatpush1.msra.mxu0 0.0
    %1455 = vmatprep.subr.mxu0 0.0
    %1456 = vmatpush1.msra.mxu0 0.0
    %1457 = vmatprep.subr.mxu0 0.0
    %1458 = vmatpush1.msra.mxu0 0.0
    %1459 = vmatprep.subr.mxu0 0.0
    %1460 = vmatpush1.msra.mxu0 0.0
    %1461 = vmatprep.subr.mxu0 0.0
    %1462 = vmatpush1.msra.mxu0 0.0
    %1463 = vmatprep.subr.mxu0 0.0
    %1464 = vmatpush1.msra.mxu0 0.0
    %1465 = vmatprep.subr.mxu0 0.0
    %1466 = vmatpush1.msra.mxu0 0.0
    %1467 = vmatprep.subr.mxu0 0.0
    %1468 = vmatpush1.msra.mxu0 0.0
    %1469 = vmatprep.subr.mxu0 0.0
    %1470 = vmatpush1.msra.mxu0 0.0
    %1471 = vmatprep.subr.mxu0 0.0
    %1472 = vmatpush1.msra.mxu0 0.0
    %1473 = vmatprep.subr.mxu0 0.0
    %1474 = vmatpush1.msra.mxu0 0.0
    %1475 = vmatprep.subr.mxu0 0.0
    %1476 = vmatpush1.msra.mxu0 0.0
    %1477 = vmatprep.subr.mxu0 0.0
    %1478 = vmatpush1.msra.mxu0 0.0
    %1479 = vmatprep.subr.mxu0 0.0
    %1480 = vmatpush1.msra.mxu0 0.0
    %1481 = vmatprep.subr.mxu0 0.0
    %1482 = vmatpush1.msra.mxu0 0.0
    %1483 = vmatprep.subr.mxu0 0.0
    %1484 = vmatpush1.msra.mxu0 0.0
    %1485 = vmatprep.subr.mxu0 0.0
    %1486 = vmatpush1.msra.mxu0 0.0
    %1487 = vmatprep.subr.mxu0 0.0
    %1488 = vmatpush1.msra.mxu0 0.0
    %1489 = vmatprep.mubr.f32.mxu0 0.0
    %1490 = vmatmul.mubr.f32.gmra.mrb[0].mxu0 %v1423
    %v1491 = vpop.f32.mrb[0].mxu0
    %v1492 = vadd.f32 0.0, %v1491
    %v1493 = vpop.f32.mrb[0].mxu0
    %1494 = vdwg.mxu0
    %v1496 = vrot.slane %v1492, 2
    %v1498 = vadd.f32 %v1103, %v1496
    %v1499 = vxor.u32 %v1498, 2147483648
    %v1500 = vmul.f32 %v1499, 1.442695
    %v1501 = vpow.pop %v1500
    %v1502 = vadd.f32 %v1501, 1.0
    %v1503 = vrcp.pop %v1502
    %v1504 = vmul.f32 1.0, %v1503
    %v1505 = vtanh.pop %v1498
    %v1507 = vrot.slane %v1412, 6
    %v1509 = vmul.f32 %v1504, %v1507
    %1511 = vrot.lane.b32.xlu0 %v1505, 64
    %v1512 = vpop.permute.xlu0 %1511
    %v1514 = vmul.f32 %v1504, %v1512
    %1516 = vrot.lane.b32.xlu0 %v1514, 32
    %v1517 = vpop.permute.xlu0 %1516
    %v1519 = vadd.f32 %v1509, %v1517
    %v1520 = vtanh.pop %v1519
    %1522 = vrot.lane.b32.xlu0 %v1520, 64
    %v1523 = vpop.permute.xlu0 %1522
    %v1525 = vmul.f32 %v1504, %v1523
    %v1527 = vrot.slane %v1525, 6
    %1528 = vrot.lane.b32.xlu0 %v1527, 32
    %v1529 = vpop.permute.xlu0 %1528
    %v1530 = vsel %vm159, %v1529, 0
    %1532 = vmatprep.subr.mxu0 0.0
    %1533 = vmatpush1.msra.mxu0 %v1015
    %1534 = vmatprep.subr.mxu0 0.0
    %1535 = vmatpush1.msra.mxu0 %v1016
    %1536 = vmatprep.subr.mxu0 0.0
    %1537 = vmatpush1.msra.mxu0 %v1017
    %1538 = vmatprep.subr.mxu0 0.0
    %1539 = vmatpush1.msra.mxu0 %v1018
    %1540 = vmatprep.subr.mxu0 0.0
    %1541 = vmatpush1.msra.mxu0 0.0
    %1542 = vmatprep.subr.mxu0 0.0
    %1543 = vmatpush1.msra.mxu0 0.0
    %1544 = vmatprep.subr.mxu0 0.0
    %1545 = vmatpush1.msra.mxu0 0.0
    %1546 = vmatprep.subr.mxu0 0.0
    %1547 = vmatpush1.msra.mxu0 0.0
    %1548 = vmatprep.subr.mxu0 0.0
    %1549 = vmatpush1.msra.mxu0 0.0
    %1550 = vmatprep.subr.mxu0 0.0
    %1551 = vmatpush1.msra.mxu0 0.0
    %1552 = vmatprep.subr.mxu0 0.0
    %1553 = vmatpush1.msra.mxu0 0.0
    %1554 = vmatprep.subr.mxu0 0.0
    %1555 = vmatpush1.msra.mxu0 0.0
    %1556 = vmatprep.subr.mxu0 0.0
    %1557 = vmatpush1.msra.mxu0 0.0
    %1558 = vmatprep.subr.mxu0 0.0
    %1559 = vmatpush1.msra.mxu0 0.0
    %1560 = vmatprep.subr.mxu0 0.0
    %1561 = vmatpush1.msra.mxu0 0.0
    %1562 = vmatprep.subr.mxu0 0.0
    %1563 = vmatpush1.msra.mxu0 0.0
    %1564 = vmatprep.subr.mxu0 0.0
    %1565 = vmatpush1.msra.mxu0 0.0
    %1566 = vmatprep.subr.mxu0 0.0
    %1567 = vmatpush1.msra.mxu0 0.0
    %1568 = vmatprep.subr.mxu0 0.0
    %1569 = vmatpush1.msra.mxu0 0.0
    %1570 = vmatprep.subr.mxu0 0.0
    %1571 = vmatpush1.msra.mxu0 0.0
    %1572 = vmatprep.subr.mxu0 0.0
    %1573 = vmatpush1.msra.mxu0 0.0
    %1574 = vmatprep.subr.mxu0 0.0
    %1575 = vmatpush1.msra.mxu0 0.0
    %1576 = vmatprep.subr.mxu0 0.0
    %1577 = vmatpush1.msra.mxu0 0.0
    %1578 = vmatprep.subr.mxu0 0.0
    %1579 = vmatpush1.msra.mxu0 0.0
    %1580 = vmatprep.subr.mxu0 0.0
    %1581 = vmatpush1.msra.mxu0 0.0
    %1582 = vmatprep.subr.mxu0 0.0
    %1583 = vmatpush1.msra.mxu0 0.0
    %1584 = vmatprep.subr.mxu0 0.0
    %1585 = vmatpush1.msra.mxu0 0.0
    %1586 = vmatprep.subr.mxu0 0.0
    %1587 = vmatpush1.msra.mxu0 0.0
    %1588 = vmatprep.subr.mxu0 0.0
    %1589 = vmatpush1.msra.mxu0 0.0
    %1590 = vmatprep.subr.mxu0 0.0
    %1591 = vmatpush1.msra.mxu0 0.0
    %1592 = vmatprep.subr.mxu0 0.0
    %1593 = vmatpush1.msra.mxu0 0.0
    %1594 = vmatprep.subr.mxu0 0.0
    %1595 = vmatpush1.msra.mxu0 0.0
    %1596 = vmatprep.mubr.f32.mxu0 0.0
    %1597 = vmatmul.mubr.f32.gmra.mrb[0].mxu0 %v1530
    %v1598 = vpop.f32.mrb[0].mxu0
    %v1599 = vadd.f32 0.0, %v1598
    %v1600 = vpop.f32.mrb[0].mxu0
    %1601 = vdwg.mxu0
    %v1602 = vadd.f32 %v1108, %v1599
    %v1603 = vxor.u32 %v1602, 2147483648
    %v1604 = vmul.f32 %v1603, 1.442695
    %v1605 = vpow.pop %v1604
    %v1606 = vadd.f32 %v1605, 1.0
    %v1607 = vrcp.pop %v1606
    %v1608 = vmul.f32 1.0, %v1607
    %v1609 = vtanh.pop %v1602
    %v1611 = vrot.slane %v1519, 6
    %v1613 = vmul.f32 %v1608, %v1611
    %1615 = vrot.lane.b32.xlu0 %v1609, 64
    %v1616 = vpop.permute.xlu0 %1615
    %v1618 = vmul.f32 %v1608, %v1616
    %1620 = vrot.lane.b32.xlu0 %v1618, 32
    %v1621 = vpop.permute.xlu0 %1620
    %v1623 = vadd.f32 %v1613, %v1621
    %v1624 = vtanh.pop %v1623
    %1626 = vrot.lane.b32.xlu0 %v1624, 64
    %v1627 = vpop.permute.xlu0 %1626
    %v1629 = vmul.f32 %v1608, %v1627
    %1631 = vrot.lane.b32.xlu0 %v1629, 32
    %v1632 = vpop.permute.xlu0 %1631
    %v1633 = vsel %vm159, %v1632, 0
    %1635 = vmatprep.subr.mxu0 0.0
    %1636 = vmatpush1.msra.mxu0 %v1015
    %1637 = vmatprep.subr.mxu0 0.0
    %1638 = vmatpush1.msra.mxu0 %v1016
    %1639 = vmatprep.subr.mxu0 0.0
    %1640 = vmatpush1.msra.mxu0 %v1017
    %1641 = vmatprep.subr.mxu0 0.0
    %1642 = vmatpush1.msra.mxu0 %v1018
    %1643 = vmatprep.subr.mxu0 0.0
    %1644 = vmatpush1.msra.mxu0 0.0
    %1645 = vmatprep.subr.mxu0 0.0
    %1646 = vmatpush1.msra.mxu0 0.0
    %1647 = vmatprep.subr.mxu0 0.0
    %1648 = vmatpush1.msra.mxu0 0.0
    %1649 = vmatprep.subr.mxu0 0.0
    %1650 = vmatpush1.msra.mxu0 0.0
    %1651 = vmatprep.subr.mxu0 0.0
    %1652 = vmatpush1.msra.mxu0 0.0
    %1653 = vmatprep.subr.mxu0 0.0
    %1654 = vmatpush1.msra.mxu0 0.0
    %1655 = vmatprep.subr.mxu0 0.0
    %1656 = vmatpush1.msra.mxu0 0.0
    %1657 = vmatprep.subr.mxu0 0.0
    %1658 = vmatpush1.msra.mxu0 0.0
    %1659 = vmatprep.subr.mxu0 0.0
    %1660 = vmatpush1.msra.mxu0 0.0
    %1661 = vmatprep.subr.mxu0 0.0
    %1662 = vmatpush1.msra.mxu0 0.0
    %1663 = vmatprep.subr.mxu0 0.0
    %1664 = vmatpush1.msra.mxu0 0.0
    %1665 = vmatprep.subr.mxu0 0.0
    %1666 = vmatpush1.msra.mxu0 0.0
    %1667 = vmatprep.subr.mxu0 0.0
    %1668 = vmatpush1.msra.mxu0 0.0
    %1669 = vmatprep.subr.mxu0 0.0
    %1670 = vmatpush1.msra.mxu0 0.0
    %1671 = vmatprep.subr.mxu0 0.0
    %1672 = vmatpush1.msra.mxu0 0.0
    %1673 = vmatprep.subr.mxu0 0.0
    %1674 = vmatpush1.msra.mxu0 0.0
    %1675 = vmatprep.subr.mxu0 0.0
    %1676 = vmatpush1.msra.mxu0 0.0
    %1677 = vmatprep.subr.mxu0 0.0
    %1678 = vmatpush1.msra.mxu0 0.0
    %1679 = vmatprep.subr.mxu0 0.0
    %1680 = vmatpush1.msra.mxu0 0.0
    %1681 = vmatprep.subr.mxu0 0.0
    %1682 = vmatpush1.msra.mxu0 0.0
    %1683 = vmatprep.subr.mxu0 0.0
    %1684 = vmatpush1.msra.mxu0 0.0
    %1685 = vmatprep.subr.mxu0 0.0
    %1686 = vmatpush1.msra.mxu0 0.0
    %1687 = vmatprep.subr.mxu0 0.0
    %1688 = vmatpush1.msra.mxu0 0.0
    %1689 = vmatprep.subr.mxu0 0.0
    %1690 = vmatpush1.msra.mxu0 0.0
    %1691 = vmatprep.subr.mxu0 0.0
    %1692 = vmatpush1.msra.mxu0 0.0
    %1693 = vmatprep.subr.mxu0 0.0
    %1694 = vmatpush1.msra.mxu0 0.0
    %1695 = vmatprep.subr.mxu0 0.0
    %1696 = vmatpush1.msra.mxu0 0.0
    %1697 = vmatprep.subr.mxu0 0.0
    %1698 = vmatpush1.msra.mxu0 0.0
    %1699 = vmatprep.mubr.f32.mxu0 0.0
    %1700 = vmatmul.mubr.f32.gmra.mrb[0].mxu0 %v1633
    %v1701 = vpop.f32.mrb[0].mxu0
    %v1702 = vadd.f32 0.0, %v1701
    %v1703 = vpop.f32.mrb[0].mxu0
    %1704 = vdwg.mxu0
    %v1706 = vrot.slane %v1702, 6
    %v1708 = vadd.f32 %v1108, %v1706
    %v1709 = vxor.u32 %v1708, 2147483648
    %v1710 = vmul.f32 %v1709, 1.442695
    %v1711 = vpow.pop %v1710
    %v1712 = vadd.f32 %v1711, 1.0
    %v1713 = vrcp.pop %v1712
    %v1714 = vmul.f32 1.0, %v1713
    %v1715 = vtanh.pop %v1708
    %v1717 = vrot.slane %v1623, 6
    %v1719 = vmul.f32 %v1714, %v1717
    %1721 = vrot.lane.b32.xlu0 %v1715, 64
    %v1722 = vpop.permute.xlu0 %1721
    %v1724 = vmul.f32 %v1714, %v1722
    %1726 = vrot.lane.b32.xlu0 %v1724, 32
    %v1727 = vpop.permute.xlu0 %1726
    %v1729 = vadd.f32 %v1719, %v1727
    %v1730 = vtanh.pop %v1729
    %1732 = vrot.lane.b32.xlu0 %v1730, 64
    %v1733 = vpop.permute.xlu0 %1732
    %v1735 = vmul.f32 %v1714, %v1733
    %v1737 = vrot.slane %v1735, 2
    %1738 = vrot.lane.b32.xlu0 %v1737, 32
    %v1739 = vpop.permute.xlu0 %1738
    %v1740 = vsel %vm159, %v1739, 0
    %1742 = vmatprep.subr.mxu0 0.0
    %1743 = vmatpush1.msra.mxu0 %v1015
    %1744 = vmatprep.subr.mxu0 0.0
    %1745 = vmatpush1.msra.mxu0 %v1016
    %1746 = vmatprep.subr.mxu0 0.0
    %1747 = vmatpush1.msra.mxu0 %v1017
    %1748 = vmatprep.subr.mxu0 0.0
    %1749 = vmatpush1.msra.mxu0 %v1018
    %1750 = vmatprep.subr.mxu0 0.0
    %1751 = vmatpush1.msra.mxu0 0.0
    %1752 = vmatprep.subr.mxu0 0.0
    %1753 = vmatpush1.msra.mxu0 0.0
    %1754 = vmatprep.subr.mxu0 0.0
    %1755 = vmatpush1.msra.mxu0 0.0
    %1756 = vmatprep.subr.mxu0 0.0
    %1757 = vmatpush1.msra.mxu0 0.0
    %1758 = vmatprep.subr.mxu0 0.0
    %1759 = vmatpush1.msra.mxu0 0.0
    %1760 = vmatprep.subr.mxu0 0.0
    %1761 = vmatpush1.msra.mxu0 0.0
    %1762 = vmatprep.subr.mxu0 0.0
    %1763 = vmatpush1.msra.mxu0 0.0
    %1764 = vmatprep.subr.mxu0 0.0
    %1765 = vmatpush1.msra.mxu0 0.0
    %1766 = vmatprep.subr.mxu0 0.0
    %1767 = vmatpush1.msra.mxu0 0.0
    %1768 = vmatprep.subr.mxu0 0.0
    %1769 = vmatpush1.msra.mxu0 0.0
    %1770 = vmatprep.subr.mxu0 0.0
    %1771 = vmatpush1.msra.mxu0 0.0
    %1772 = vmatprep.subr.mxu0 0.0
    %1773 = vmatpush1.msra.mxu0 0.0
    %1774 = vmatprep.subr.mxu0 0.0
    %1775 = vmatpush1.msra.mxu0 0.0
    %1776 = vmatprep.subr.mxu0 0.0
    %1777 = vmatpush1.msra.mxu0 0.0
    %1778 = vmatprep.subr.mxu0 0.0
    %1779 = vmatpush1.msra.mxu0 0.0
    %1780 = vmatprep.subr.mxu0 0.0
    %1781 = vmatpush1.msra.mxu0 0.0
    %1782 = vmatprep.subr.mxu0 0.0
    %1783 = vmatpush1.msra.mxu0 0.0
    %1784 = vmatprep.subr.mxu0 0.0
    %1785 = vmatpush1.msra.mxu0 0.0
    %1786 = vmatprep.subr.mxu0 0.0
    %1787 = vmatpush1.msra.mxu0 0.0
    %1788 = vmatprep.subr.mxu0 0.0
    %1789 = vmatpush1.msra.mxu0 0.0
    %1790 = vmatprep.subr.mxu0 0.0
    %1791 = vmatpush1.msra.mxu0 0.0
    %1792 = vmatprep.subr.mxu0 0.0
    %1793 = vmatpush1.msra.mxu0 0.0
    %1794 = vmatprep.subr.mxu0 0.0
    %1795 = vmatpush1.msra.mxu0 0.0
    %1796 = vmatprep.subr.mxu0 0.0
    %1797 = vmatpush1.msra.mxu0 0.0
    %1798 = vmatprep.subr.mxu0 0.0
    %1799 = vmatpush1.msra.mxu0 0.0
    %1800 = vmatprep.subr.mxu0 0.0
    %1801 = vmatpush1.msra.mxu0 0.0
    %1802 = vmatprep.subr.mxu0 0.0
    %1803 = vmatpush1.msra.mxu0 0.0
    %1804 = vmatprep.subr.mxu0 0.0
    %1805 = vmatpush1.msra.mxu0 0.0
    %1806 = vmatprep.mubr.f32.mxu0 0.0
    %1807 = vmatmul.mubr.f32.gmra.mrb[0].mxu0 %v1740
    %v1808 = vpop.f32.mrb[0].mxu0
    %v1809 = vadd.f32 0.0, %v1808
    %v1810 = vpop.f32.mrb[0].mxu0
    %1811 = vdwg.mxu0
    %v1813 = vrot.slane %v1809, 4
    %v1815 = vadd.f32 %v1108, %v1813
    %v1816 = vxor.u32 %v1815, 2147483648
    %v1817 = vmul.f32 %v1816, 1.442695
    %v1818 = vpow.pop %v1817
    %v1819 = vadd.f32 %v1818, 1.0
    %v1820 = vrcp.pop %v1819
    %v1821 = vmul.f32 1.0, %v1820
    %v1822 = vtanh.pop %v1815
    %v1824 = vrot.slane %v1729, 6
    %v1826 = vmul.f32 %v1821, %v1824
    %1828 = vrot.lane.b32.xlu0 %v1822, 64
    %v1829 = vpop.permute.xlu0 %1828
    %v1831 = vmul.f32 %v1821, %v1829
    %1833 = vrot.lane.b32.xlu0 %v1831, 32
    %v1834 = vpop.permute.xlu0 %1833
    %v1836 = vadd.f32 %v1826, %v1834
    %v1837 = vtanh.pop %v1836
    %1839 = vrot.lane.b32.xlu0 %v1837, 64
    %v1840 = vpop.permute.xlu0 %1839
    %v1842 = vmul.f32 %v1821, %v1840
    %v1844 = vrot.slane %v1842, 4
    %1845 = vrot.lane.b32.xlu0 %v1844, 32
    %v1846 = vpop.permute.xlu0 %1845
    %v1847 = vsel %vm159, %v1846, 0
    %1849 = vmatprep.subr.mxu0 0.0
    %1850 = vmatpush1.msra.mxu0 %v1015
    %1851 = vmatprep.subr.mxu0 0.0
    %1852 = vmatpush1.msra.mxu0 %v1016
    %1853 = vmatprep.subr.mxu0 0.0
    %1854 = vmatpush1.msra.mxu0 %v1017
    %1855 = vmatprep.subr.mxu0 0.0
    %1856 = vmatpush1.msra.mxu0 %v1018
    %1857 = vmatprep.subr.mxu0 0.0
    %1858 = vmatpush1.msra.mxu0 0.0
    %1859 = vmatprep.subr.mxu0 0.0
    %1860 = vmatpush1.msra.mxu0 0.0
    %1861 = vmatprep.subr.mxu0 0.0
    %1862 = vmatpush1.msra.mxu0 0.0
    %1863 = vmatprep.subr.mxu0 0.0
    %1864 = vmatpush1.msra.mxu0 0.0
    %1865 = vmatprep.subr.mxu0 0.0
    %1866 = vmatpush1.msra.mxu0 0.0
    %1867 = vmatprep.subr.mxu0 0.0
    %1868 = vmatpush1.msra.mxu0 0.0
    %1869 = vmatprep.subr.mxu0 0.0
    %1870 = vmatpush1.msra.mxu0 0.0
    %1871 = vmatprep.subr.mxu0 0.0
    %1872 = vmatpush1.msra.mxu0 0.0
    %1873 = vmatprep.subr.mxu0 0.0
    %1874 = vmatpush1.msra.mxu0 0.0
    %1875 = vmatprep.subr.mxu0 0.0
    %1876 = vmatpush1.msra.mxu0 0.0
    %1877 = vmatprep.subr.mxu0 0.0
    %1878 = vmatpush1.msra.mxu0 0.0
    %1879 = vmatprep.subr.mxu0 0.0
    %1880 = vmatpush1.msra.mxu0 0.0
    %1881 = vmatprep.subr.mxu0 0.0
    %1882 = vmatpush1.msra.mxu0 0.0
    %1883 = vmatprep.subr.mxu0 0.0
    %1884 = vmatpush1.msra.mxu0 0.0
    %1885 = vmatprep.subr.mxu0 0.0
    %1886 = vmatpush1.msra.mxu0 0.0
    %1887 = vmatprep.subr.mxu0 0.0
    %1888 = vmatpush1.msra.mxu0 0.0
    %1889 = vmatprep.subr.mxu0 0.0
    %1890 = vmatpush1.msra.mxu0 0.0
    %1891 = vmatprep.subr.mxu0 0.0
    %1892 = vmatpush1.msra.mxu0 0.0
    %1893 = vmatprep.subr.mxu0 0.0
    %1894 = vmatpush1.msra.mxu0 0.0
    %1895 = vmatprep.subr.mxu0 0.0
    %1896 = vmatpush1.msra.mxu0 0.0
    %1897 = vmatprep.subr.mxu0 0.0
    %1898 = vmatpush1.msra.mxu0 0.0
    %1899 = vmatprep.subr.mxu0 0.0
    %1900 = vmatpush1.msra.mxu0 0.0
    %1901 = vmatprep.subr.mxu0 0.0
    %1902 = vmatpush1.msra.mxu0 0.0
    %1903 = vmatprep.subr.mxu0 0.0
    %1904 = vmatpush1.msra.mxu0 0.0
    %1905 = vmatprep.subr.mxu0 0.0
    %1906 = vmatpush1.msra.mxu0 0.0
    %1907 = vmatprep.subr.mxu0 0.0
    %1908 = vmatpush1.msra.mxu0 0.0
    %1909 = vmatprep.subr.mxu0 0.0
    %1910 = vmatpush1.msra.mxu0 0.0
    %1911 = vmatprep.subr.mxu0 0.0
    %1912 = vmatpush1.msra.mxu0 0.0
    %1913 = vmatprep.mubr.f32.mxu0 0.0
    %1914 = vmatmul.mubr.f32.gmra.mrb[0].mxu0 %v1847
    %v1915 = vpop.f32.mrb[0].mxu0
    %v1916 = vadd.f32 0.0, %v1915
    %v1917 = vpop.f32.mrb[0].mxu0
    %1918 = vdwg.mxu0
    %v1920 = vrot.slane %v1916, 2
    %v1922 = vadd.f32 %v1108, %v1920
    %v1923 = vxor.u32 %v1922, 2147483648
    %v1924 = vmul.f32 %v1923, 1.442695
    %v1925 = vpow.pop %v1924
    %v1926 = vadd.f32 %v1925, 1.0
    %v1927 = vrcp.pop %v1926
    %v1928 = vmul.f32 1.0, %v1927
    %v1929 = vtanh.pop %v1922
    %v1931 = vrot.slane %v1836, 6
    %v1933 = vmul.f32 %v1928, %v1931
    %1935 = vrot.lane.b32.xlu0 %v1929, 64
    %v1936 = vpop.permute.xlu0 %1935
    %v1938 = vmul.f32 %v1928, %v1936
    %1940 = vrot.lane.b32.xlu0 %v1938, 32
    %v1941 = vpop.permute.xlu0 %1940
    %v1943 = vadd.f32 %v1933, %v1941
    %v1944 = vtanh.pop %v1943
    %1946 = vrot.lane.b32.xlu0 %v1944, 64
    %v1947 = vpop.permute.xlu0 %1946
    %v1949 = vmul.f32 %v1928, %v1947
    %v1950 = vld [vmem:[%s7] sm:$0xff]
    %v1951 = vld [vmem:[%s7 + $0x8] sm:$0xff]
    %v1952 = vld [vmem:[%s7 + $0x10] sm:$0xff]
    %v1953 = vld [vmem:[%s7 + $0x18] sm:$0xff]
    %v1954 = vld [vmem:[%s8] sm:$0x1]
    %v1956 = vlaneseq
    %v1957 = vshrl.u32 %v1956, 7
    %v1958 = vsub.s32 0, %v1957
    %v1959 = vrot.slane %v1954, %v1958
    %v1962 = vrot.slane %v1949, 6
    %1963 = vrot.lane.b32.xlu0 %v1962, 32
    %v1964 = vpop.permute.xlu0 %1963
    %v1965 = vsel %vm159, %v1964, 0
    %1967 = vmatprep.subr.mxu0 0.0
    %1968 = vmatpush1.msra.mxu0 %v1950
    %1969 = vmatprep.subr.mxu0 0.0
    %1970 = vmatpush1.msra.mxu0 %v1951
    %1971 = vmatprep.subr.mxu0 0.0
    %1972 = vmatpush1.msra.mxu0 %v1952
    %1973 = vmatprep.subr.mxu0 0.0
    %1974 = vmatpush1.msra.mxu0 %v1953
    %1975 = vmatprep.subr.mxu0 0.0
    %1976 = vmatpush1.msra.mxu0 0.0
    %1977 = vmatprep.subr.mxu0 0.0
    %1978 = vmatpush1.msra.mxu0 0.0
    %1979 = vmatprep.subr.mxu0 0.0
    %1980 = vmatpush1.msra.mxu0 0.0
    %1981 = vmatprep.subr.mxu0 0.0
    %1982 = vmatpush1.msra.mxu0 0.0
    %1983 = vmatprep.subr.mxu0 0.0
    %1984 = vmatpush1.msra.mxu0 0.0
    %1985 = vmatprep.subr.mxu0 0.0
    %1986 = vmatpush1.msra.mxu0 0.0
    %1987 = vmatprep.subr.mxu0 0.0
    %1988 = vmatpush1.msra.mxu0 0.0
    %1989 = vmatprep.subr.mxu0 0.0
    %1990 = vmatpush1.msra.mxu0 0.0
    %1991 = vmatprep.subr.mxu0 0.0
    %1992 = vmatpush1.msra.mxu0 0.0
    %1993 = vmatprep.subr.mxu0 0.0
    %1994 = vmatpush1.msra.mxu0 0.0
    %1995 = vmatprep.subr.mxu0 0.0
    %1996 = vmatpush1.msra.mxu0 0.0
    %1997 = vmatprep.subr.mxu0 0.0
    %1998 = vmatpush1.msra.mxu0 0.0
    %1999 = vmatprep.subr.mxu0 0.0
    %2000 = vmatpush1.msra.mxu0 0.0
    %2001 = vmatprep.subr.mxu0 0.0
    %2002 = vmatpush1.msra.mxu0 0.0
    %2003 = vmatprep.subr.mxu0 0.0
    %2004 = vmatpush1.msra.mxu0 0.0
    %2005 = vmatprep.subr.mxu0 0.0
    %2006 = vmatpush1.msra.mxu0 0.0
    %2007 = vmatprep.subr.mxu0 0.0
    %2008 = vmatpush1.msra.mxu0 0.0
    %2009 = vmatprep.subr.mxu0 0.0
    %2010 = vmatpush1.msra.mxu0 0.0
    %2011 = vmatprep.subr.mxu0 0.0
    %2012 = vmatpush1.msra.mxu0 0.0
    %2013 = vmatprep.subr.mxu0 0.0
    %2014 = vmatpush1.msra.mxu0 0.0
    %2015 = vmatprep.subr.mxu0 0.0
    %2016 = vmatpush1.msra.mxu0 0.0
    %2017 = vmatprep.subr.mxu0 0.0
    %2018 = vmatpush1.msra.mxu0 0.0
    %2019 = vmatprep.subr.mxu0 0.0
    %2020 = vmatpush1.msra.mxu0 0.0
    %2021 = vmatprep.subr.mxu0 0.0
    %2022 = vmatpush1.msra.mxu0 0.0
    %2023 = vmatprep.subr.mxu0 0.0
    %2024 = vmatpush1.msra.mxu0 0.0
    %2025 = vmatprep.subr.mxu0 0.0
    %2026 = vmatpush1.msra.mxu0 0.0
    %2027 = vmatprep.subr.mxu0 0.0
    %2028 = vmatpush1.msra.mxu0 0.0
    %2029 = vmatprep.subr.mxu0 0.0
    %2030 = vmatpush1.msra.mxu0 0.0
    %2031 = vmatprep.mubr.f32.mxu0 0.0
    %2032 = vmatmul.mubr.f32.gmra.mrb[0].mxu0 %v1965
    %v2033 = vpop.f32.mrb[0].mxu0
    %v2034 = vadd.f32 %v1959, %v2033
    %v2035 = vpop.f32.mrb[0].mxu0
    %2036 = vdwg.mxu0
    %vm2037 = vcmask 17408
    %2038 = vst.msk [vmem:[#allocation7] sm:$0x3] %vm2037, %v2034
    // Predicated region
    $region46: #{tpu_custom_call.1} parent=1 // pred_check
      _
    $region47: #{tpu_custom_call.1} parent=1 // pred_check_branch
      %2040 = sbr.rel (0) target = $region49
    $region48: #{tpu_custom_call.1} parent=1 // pred_region
      %s2042 = ssub.s32 32, 32
      %2043 = vsyncadd [#allocation4], %s2042
      %s2045 = sshll.u32 [#allocation7], 4
      %s2046 = int_to_ptr.vmem [resolvable:$true] %s2045
      %2048 = dma.vmem_to_hbm [thread:$0]  %s2046, 32, %s9, [#allocation4]
    $region49: #{tpu_custom_call.1} parent=1 // pred_fallthru
      _
    // Predicated region
    $region50: #{tpu_custom_call.1} parent=1 // pred_check
      _
    $region51: #{tpu_custom_call.1} parent=1 // pred_check_branch
      %2050 = sbr.rel (0) target = $region53
    $region52: #{tpu_custom_call.1} parent=1 // pred_region
      %2051 = dma.done [#allocation4], 32
    $region53: #{tpu_custom_call.1} parent=1 // pred_fallthru
      _
    %2052 = vsyncpa [#allocation3], 1
    %2053 = vsyncpa [#allocation6], 1
    %2054 = vsyncpa [#allocation4], 1

</llo_original>
